<compile_context>
chip_gen: v7x
topology: tpu7x:2x2x1
jax: 0.10.0
libtpu: 0.0.40
codegen_flags: <defaults>
</compile_context>

<pallas_src>
import math
import jax
import jax.numpy as jnp
from jax.experimental import pallas as pl
from jax.experimental.pallas import tpu as pltpu


# ---------------------------------------------------------------------------
# Stage 1: input projection (fully parallel over the T*B rows), bf16 output.
def _input_proj_kernel(x_ref, wih_ref, b_ref, gx_ref):
    acc = (jnp.dot(x_ref[...].astype(wih_ref.dtype), wih_ref[...],
                   preferred_element_type=jnp.float32)
           + b_ref[...])
    gx_ref[...] = acc.astype(gx_ref.dtype)


# ---------------------------------------------------------------------------
# Stage 2 (fused): serial LSTM recurrence over a time chunk + LayerNorm/FC/sigmoid
# epilogue on the whole chunk.  h/c state persists in VMEM scratch across chunks.
def _make_fused_recurrence_kernel(tc, B_pad, H, unroll):
    def kernel(gx_ref, whh_ref, gamma_ref, beta_ref, wfc_ref, bfc_ref,
               o_ref, h_sc, c_sc, hbuf_sc):
        # init recurrent state on the first time chunk
        @pl.when(pl.program_id(0) == 0)
        def _():
            h_sc[...] = jnp.zeros_like(h_sc)
            c_sc[...] = jnp.zeros_like(c_sc)

        whh = whh_ref[...]          # resident (H, 4H) weight, loaded once per chunk

        def step(tt, carry):
            h, c = carry
            r0 = pl.multiple_of(tt * B_pad, B_pad)   # sublane-aligned row offset
            # Only one small matmul per step; x-projection + bias were hoisted out.
            gates = (gx_ref[pl.ds(r0, B_pad), :].astype(jnp.float32)
                     + jnp.dot(h.astype(whh.dtype), whh,
                               preferred_element_type=jnp.float32))
            # Gate layout is (i, f, o, g): ONE sigmoid over the first 3H columns and
            # one tanh over the last H (fewer EUP round trips on the serial path).
            # NOTE: for production H (multiple of 128) these slices are lane-aligned
            # free views; at toy H=32 they cost a few intra-vreg selects.
            sig = jax.nn.sigmoid(gates[:, :3 * H])
            g_g = jnp.tanh(gates[:, 3 * H:])
            i_g = sig[:, 0 * H:1 * H]
            f_g = sig[:, 1 * H:2 * H]
            o_g = sig[:, 2 * H:3 * H]
            c_new = f_g * c + i_g * g_g
            h_new = o_g * jnp.tanh(c_new)
            hbuf_sc[pl.ds(r0, B_pad), :] = h_new     # stays in VMEM; no HBM round trip
            return h_new, c_new

        h_fin, c_fin = jax.lax.fori_loop(
            0, tc, step, (h_sc[...], c_sc[...]), unroll=min(unroll, tc))
        h_sc[...] = h_fin
        c_sc[...] = c_fin

        # ---- fused epilogue: LayerNorm + Dropout(identity) + Linear + Sigmoid ----
        # Runs once per chunk on the (tc*B_pad, H) slab -> one MXU-friendly matmul
        # instead of a third kernel (and no h_all HBM write/read).
        hc = hbuf_sc[...]
        mean = jnp.mean(hc, axis=-1, keepdims=True)
        var = jnp.mean((hc - mean) ** 2, axis=-1, keepdims=True)   # biased, eps=1e-5
        ln = (hc - mean) * jax.lax.rsqrt(var + 1e-5) * gamma_ref[...] + beta_ref[...]
        # TODO(synk): nn.Dropout is identity in eval/inference mode; training would
        # need a pltpu.prng_* mask here.
        y = (jnp.dot(ln.astype(wfc_ref.dtype), wfc_ref[...],
                     preferred_element_type=jnp.float32)
             + bfc_ref[...])
        o_ref[...] = jax.nn.sigmoid(y)

    return kernel


# ---------------------------------------------------------------------------
def _round_up(x, m):
    return ((x + m - 1) // m) * m


def _largest_divisor_leq(n, cap):
    for d in range(max(1, min(n, cap)), 0, -1):
        if n % d == 0:
            return d
    return 1


def _vmem_limit(nbytes):
    # explicit scoped-VMEM budget: 2x estimate + headroom, >= 32 MiB, capped at
    # 64 MiB so the request is valid on v7x as well as v5e/v6e.
    return int(min(max(2 * nbytes + (4 << 20), 32 << 20), 64 << 20))


def lstm_model_forward(x, params, *, t_chunk=32, row_cap=512, unroll=8):
    """x: (T, B, I) float32.  Returns (T, B, O) float32."""
    T, B, I = x.shape
    wih_t = params["wih_t"]      # (I, 4H)  bf16, gate cols ordered (i,f,o,g)
    whh_t = params["whh_t"]      # (H, 4H)  bf16
    b = params["b"]              # (1, 4H)  f32  == b_ih + b_hh (reordered)
    gamma = params["gamma"]      # (1, H)   f32
    beta = params["beta"]        # (1, H)   f32
    wfc_t = params["wfc_t"]      # (H, O)   bf16
    bfc = params["bfc"]          # (1, O)   f32
    H = whh_t.shape[0]
    O = wfc_t.shape[1]
    G = 4 * H

    # ---- padding: B to a sublane multiple, T to a multiple of the time chunk ----
    # (padded batch rows / trailing timesteps compute harmless finite values that are
    #  sliced away; a trailing zero-pad in time cannot affect earlier outputs.)
    B_pad = _round_up(B, 8)     # use 16 for bf16-LHS-heavy production runs
    d = _largest_divisor_leq(T, t_chunk)
    if d * 2 >= t_chunk or d == T:
        tc, T_pad = d, T
    else:
        tc, T_pad = min(t_chunk, T), _round_up(T, min(t_chunk, T))

    x_p = jnp.pad(x, ((0, T_pad - T), (0, B_pad - B), (0, 0)))
    rows_pad = T_pad * B_pad
    x2 = x_p.reshape(rows_pad, I)

    # Stage-1 row block: whole time chunks' worth of rows, capped near row_cap.
    rb = _largest_divisor_leq(T_pad, max(1, row_cap // B_pad)) * B_pad

    # ---- Stage 1: gates_x = x @ W_ih^T + b  (parallel, bf16 out) -----------------
    est1 = (2 * rb * I * 4 + 2 * rb * G * 2 + 2 * I * G * 2 + 2 * G * 4)
    gates_x = pl.pallas_call(
        _input_proj_kernel,
        out_shape=jax.ShapeDtypeStruct((rows_pad, G), jnp.bfloat16),
        grid_spec=pltpu.PrefetchScalarGridSpec(
            num_scalar_prefetch=0,
            grid=(rows_pad // rb,),
            in_specs=[
                pl.BlockSpec((rb, I), lambda i: (i, 0)),
                pl.BlockSpec((I, G), lambda i: (0, 0)),
                pl.BlockSpec((1, G), lambda i: (0, 0)),
            ],
            out_specs=pl.BlockSpec((rb, G), lambda i: (i, 0)),
        ),
        compiler_params=pltpu.CompilerParams(
            dimension_semantics=("parallel",),
            vmem_limit_bytes=_vmem_limit(est1)),
    )(x2, wih_t, b)

    # ---- Stage 2 (fused): serial recurrence + LN/FC/sigmoid epilogue -------------
    chunk_rows = tc * B_pad
    est2 = (2 * chunk_rows * G * 2          # gates chunk in, double-buffered bf16
            + 2 * chunk_rows * O * 4        # out chunk, double-buffered f32
            + 2 * H * G * 2                 # W_hh (double-buffered)
            + 2 * H * O * 2                 # W_fc
            + 4 * H * 4 + 2 * O * 4         # gamma/beta/bfc
            + 2 * B_pad * H * 4             # h, c state scratch
            + chunk_rows * H * 4)           # chunk h buffer
    kernel = _make_fused_recurrence_kernel(tc, B_pad, H, unroll)
    out2d = pl.pallas_call(
        kernel,
        out_shape=jax.ShapeDtypeStruct((rows_pad, O), jnp.float32),
        grid_spec=pltpu.PrefetchScalarGridSpec(
            num_scalar_prefetch=0,
            grid=(T_pad // tc,),
            in_specs=[
                pl.BlockSpec((chunk_rows, G), lambda t: (t, 0)),   # gates_x chunk
                pl.BlockSpec((H, G), lambda t: (0, 0)),            # W_hh^T (resident)
                pl.BlockSpec((1, H), lambda t: (0, 0)),            # gamma
                pl.BlockSpec((1, H), lambda t: (0, 0)),            # beta
                pl.BlockSpec((H, O), lambda t: (0, 0)),            # W_fc^T
                pl.BlockSpec((1, O), lambda t: (0, 0)),            # b_fc
            ],
            out_specs=pl.BlockSpec((chunk_rows, O), lambda t: (t, 0)),
            scratch_shapes=[
                pltpu.VMEM((B_pad, H), jnp.float32),        # h state (persists)
                pltpu.VMEM((B_pad, H), jnp.float32),        # c state (persists)
                pltpu.VMEM((chunk_rows, H), jnp.float32),   # chunk h buffer
            ],
        ),
        compiler_params=pltpu.CompilerParams(
            dimension_semantics=("arbitrary",),   # time recurrence must stay serial
            vmem_limit_bytes=_vmem_limit(est2)),
    )(gates_x, whh_t, gamma, beta, wfc_t, bfc)

    return out2d.reshape(T_pad, B_pad, O)[:T, :B, :]


# ---------------------------------------------------------------------------
def init_params(key, input_size, hidden_size, output_size,
                matmul_dtype=jnp.bfloat16):
    """PyTorch-style shapes/init (uniform(-1/sqrt(H), 1/sqrt(H))); gate blocks are
    permuted from PyTorch's (i,f,g,o) to the kernel's (i,f,o,g) order; matmul weights
    stored in bf16 (MXU operands), biases/LN params in f32."""
    ks = jax.random.split(key, 6)
    H, I, O = hidden_size, input_size, output_size
    s = 1.0 / math.sqrt(H)
    w_ih = jax.random.uniform(ks[0], (4 * H, I), jnp.float32, -s, s)   # (i,f,g,o)
    w_hh = jax.random.uniform(ks[1], (4 * H, H), jnp.float32, -s, s)
    b_ih = jax.random.uniform(ks[2], (4 * H,), jnp.float32, -s, s)
    b_hh = jax.random.uniform(ks[3], (4 * H,), jnp.float32, -s, s)
    w_fc = jax.random.uniform(ks[4], (O, H), jnp.float32, -s, s)
    b_fc = jax.random.uniform(ks[5], (O,), jnp.float32, -s, s)
    gamma = jnp.ones((H,), jnp.float32)
    beta = jnp.zeros((H,), jnp.float32)

    def reorder(w):   # gate blocks along dim 0: (i,f,g,o) -> (i,f,o,g)
        i, f, g, o = jnp.split(w, 4, axis=0)
        return jnp.concatenate([i, f, o, g], axis=0)

    return {
        "wih_t": reorder(w_ih).T.astype(matmul_dtype),             # (I, 4H)
        "whh_t": reorder(w_hh).T.astype(matmul_dtype),             # (H, 4H)
        "b": reorder((b_ih + b_hh)[:, None]).reshape(1, 4 * H),    # (1, 4H) f32
        "gamma": gamma.reshape(1, H),
        "beta": beta.reshape(1, H),
        "wfc_t": w_fc.T.astype(matmul_dtype),                      # (H, O)
        "bfc": b_fc.reshape(1, O),
    }


def lstm_model_reference(x, params):
    """Pure-JAX f32 reference (same params, weights upcast, (i,f,o,g) order)."""
    wih = params["wih_t"].astype(jnp.float32)
    whh = params["whh_t"].astype(jnp.float32)
    wfc = params["wfc_t"].astype(jnp.float32)
    b, gamma, beta, bfc = params["b"], params["gamma"], params["beta"], params["bfc"]
    T, B, _ = x.shape
    H = whh.shape[0]

    def step(carry, x_t):
        h, c = carry
        g = x_t @ wih + h @ whh + b
        i = jax.nn.sigmoid(g[:, 0 * H:1 * H])
        f = jax.nn.sigmoid(g[:, 1 * H:2 * H])
        o = jax.nn.sigmoid(g[:, 2 * H:3 * H])
        gg = jnp.tanh(g[:, 3 * H:4 * H])
        c = f * c + i * gg
        h = o * jnp.tanh(c)
        return (h, c), h

    h0 = jnp.zeros((B, H), jnp.float32)
    (_, _), hs = jax.lax.scan(step, (h0, h0), x)
    mean = hs.mean(-1, keepdims=True)
    var = ((hs - mean) ** 2).mean(-1, keepdims=True)
    ln = (hs - mean) * jax.lax.rsqrt(var + 1e-5) * gamma + beta
    return jax.nn.sigmoid(ln @ wfc + bfc)


if __name__ == "__main__":
    seq_len, batch, input_size, hidden_size, output_size = 8, 4, 16, 32, 8

    key = jax.random.PRNGKey(0)
    k_x, k_p = jax.random.split(key)
    x = jax.random.normal(k_x, (seq_len, batch, input_size), jnp.float32)
    params = init_params(k_p, input_size, hidden_size, output_size)

    fwd = jax.jit(lstm_model_forward)
    out = jax.block_until_ready(fwd(x, params))

    assert out.shape == (seq_len, batch, output_size)
    assert bool(jnp.all(jnp.isfinite(out)))

    ref = lstm_model_reference(x, params)
    assert bool(jnp.allclose(out, ref, atol=5e-2, rtol=5e-2)), \
        f"max abs err {float(jnp.max(jnp.abs(out - ref)))}"

    print("KERNEL_OK")
</pallas_src>

<mosaic_0001>
module attributes {stable_mosaic.version = 11 : i64} {
  func.func @_input_proj_kernel(%arg0: i32, %arg1: memref<64x16xf32, #tpu.memory_space<vmem>>, %arg2: memref<16x128xbf16, #tpu.memory_space<vmem>>, %arg3: memref<1x128xf32, #tpu.memory_space<vmem>>, %arg4: memref<64x128xbf16, #tpu.memory_space<vmem>>) attributes {dimension_semantics = [#tpu.dimension_semantics<parallel>], iteration_bounds = array<i64: 1>, scalar_prefetch = 0 : i64, scratch_operands = 0 : i64, tpu.core_type = #tpu.core_type<tc>, window_params = [{transform_indices = @transform_0, window_bounds = array<i64: 64, 16>}, {pipeline_mode = #tpu.pipeline_mode<synchronous>, transform_indices = @transform_1, window_bounds = array<i64: 16, 128>}, {pipeline_mode = #tpu.pipeline_mode<synchronous>, transform_indices = @transform_2, window_bounds = array<i64: 1, 128>}, {transform_indices = @transform_3, window_bounds = array<i64: 64, 128>}]} {
    %c0 = arith.constant 0 : index
    %c0_0 = arith.constant 0 : index
    %0 = vector.load %arg1[%c0, %c0_0] : memref<64x16xf32, #tpu.memory_space<vmem>>, vector<64x16xf32>
    %1 = arith.truncf %0 : vector<64x16xf32> to vector<64x16xbf16>
    %c0_1 = arith.constant 0 : index
    %c0_2 = arith.constant 0 : index
    %2 = vector.load %arg2[%c0_1, %c0_2] : memref<16x128xbf16, #tpu.memory_space<vmem>>, vector<16x128xbf16>
    %cst = arith.constant dense<0.000000e+00> : vector<64x128xf32>
    %3 = tpu.matmul %1, %2, %cst {dimension_numbers = #tpu.dot_dimension_numbers<[1], [0], [0], [1], [0, 0, 1, 1], [], []>} : vector<64x16xbf16>, vector<16x128xbf16>, vector<64x128xf32> -> vector<64x128xf32>
    %c0_3 = arith.constant 0 : index
    %c0_4 = arith.constant 0 : index
    %4 = vector.load %arg3[%c0_3, %c0_4] : memref<1x128xf32, #tpu.memory_space<vmem>>, vector<1x128xf32>
    %5 = vector.broadcast %4 : vector<1x128xf32> to vector<64x128xf32>
    %6 = arith.addf %3, %5 : vector<64x128xf32>
    %7 = arith.truncf %6 : vector<64x128xf32> to vector<64x128xbf16>
    %c0_5 = arith.constant 0 : index
    %c0_6 = arith.constant 0 : index
    %8 = vector.load %arg4[%c0_5, %c0_6] : memref<64x128xbf16, #tpu.memory_space<vmem>>, vector<64x128xbf16>
    tpu.vector_store %arg4[%c0_5, %c0_6], %7 {strides = array<i32>} : memref<64x128xbf16, #tpu.memory_space<vmem>>, vector<64x128xbf16>,
    return
  }
  func.func @transform_0(%arg0: i32) -> (i32, i32) {
    %c0_i32 = arith.constant 0 : i32
    %c0_i32_0 = arith.constant 0 : i32
    return %arg0, %c0_i32 : i32, i32
  }
  func.func @transform_1(%arg0: i32) -> (i32, i32) {
    %c0_i32 = arith.constant 0 : i32
    %c0_i32_0 = arith.constant 0 : i32
    %c0_i32_1 = arith.constant 0 : i32
    return %c0_i32, %c0_i32_0 : i32, i32
  }
  func.func @transform_2(%arg0: i32) -> (i32, i32) {
    %c0_i32 = arith.constant 0 : i32
    %c0_i32_0 = arith.constant 0 : i32
    %c0_i32_1 = arith.constant 0 : i32
    return %c0_i32, %c0_i32_0 : i32, i32
  }
  func.func @transform_3(%arg0: i32) -> (i32, i32) {
    %c0_i32 = arith.constant 0 : i32
    %c0_i32_0 = arith.constant 0 : i32
    return %arg0, %c0_i32 : i32, i32
  }
}

module attributes {stable_mosaic.version = 11 : i64} {
  func.func @kernel(%arg0: i32, %arg1: memref<64x128xbf16, #tpu.memory_space<vmem>>, %arg2: memref<32x128xbf16, #tpu.memory_space<vmem>>, %arg3: memref<1x32xf32, #tpu.memory_space<vmem>>, %arg4: memref<1x32xf32, #tpu.memory_space<vmem>>, %arg5: memref<32x8xbf16, #tpu.memory_space<vmem>>, %arg6: memref<1x8xf32, #tpu.memory_space<vmem>>, %arg7: memref<64x8xf32, #tpu.memory_space<vmem>>, %arg8: memref<8x32xf32, #tpu.memory_space<vmem>>, %arg9: memref<8x32xf32, #tpu.memory_space<vmem>>, %arg10: memref<64x32xf32, #tpu.memory_space<vmem>>) attributes {dimension_semantics = [#tpu.dimension_semantics<arbitrary>], iteration_bounds = array<i64: 1>, scalar_prefetch = 0 : i64, scratch_operands = 3 : i64, tpu.core_type = #tpu.core_type<tc>, window_params = [{transform_indices = @transform_0, window_bounds = array<i64: 64, 128>}, {pipeline_mode = #tpu.pipeline_mode<synchronous>, transform_indices = @transform_1, window_bounds = array<i64: 32, 128>}, {pipeline_mode = #tpu.pipeline_mode<synchronous>, transform_indices = @transform_2, window_bounds = array<i64: 1, 32>}, {pipeline_mode = #tpu.pipeline_mode<synchronous>, transform_indices = @transform_3, window_bounds = array<i64: 1, 32>}, {pipeline_mode = #tpu.pipeline_mode<synchronous>, transform_indices = @transform_4, window_bounds = array<i64: 32, 8>}, {pipeline_mode = #tpu.pipeline_mode<synchronous>, transform_indices = @transform_5, window_bounds = array<i64: 1, 8>}, {transform_indices = @transform_6, window_bounds = array<i64: 64, 8>}]} {
    %c0_i32 = arith.constant 0 : i32
    %0 = arith.cmpi eq, %arg0, %c0_i32 : i32
    %1 = arith.extui %0 : i1 to i32
    %c0_i32_0 = arith.constant 0 : i32
    %2 = arith.cmpi ne, %1, %c0_i32_0 : i32
    scf.if %2 {
      %cst_69 = arith.constant 0.000000e+00 : f32
      %253 = vector.broadcast %cst_69 : f32 to vector<8x32xf32>
      %c0_70 = arith.constant 0 : index
      %c0_71 = arith.constant 0 : index
      %254 = vector.load %arg8[%c0_70, %c0_71] : memref<8x32xf32, #tpu.memory_space<vmem>>, vector<8x32xf32>
      tpu.vector_store %arg8[%c0_70, %c0_71], %253 {strides = array<i32>} : memref<8x32xf32, #tpu.memory_space<vmem>>, vector<8x32xf32>,
      %cst_72 = arith.constant 0.000000e+00 : f32
      %255 = vector.broadcast %cst_72 : f32 to vector<8x32xf32>
      %c0_73 = arith.constant 0 : index
      %c0_74 = arith.constant 0 : index
      %256 = vector.load %arg9[%c0_73, %c0_74] : memref<8x32xf32, #tpu.memory_space<vmem>>, vector<8x32xf32>
      tpu.vector_store %arg9[%c0_73, %c0_74], %255 {strides = array<i32>} : memref<8x32xf32, #tpu.memory_space<vmem>>, vector<8x32xf32>,
    } else {
    }
    %c0 = arith.constant 0 : index
    %c0_1 = arith.constant 0 : index
    %3 = vector.load %arg2[%c0, %c0_1] : memref<32x128xbf16, #tpu.memory_space<vmem>>, vector<32x128xbf16>
    %c0_2 = arith.constant 0 : index
    %c0_3 = arith.constant 0 : index
    %4 = vector.load %arg8[%c0_2, %c0_3] : memref<8x32xf32, #tpu.memory_space<vmem>>, vector<8x32xf32>
    %c0_4 = arith.constant 0 : index
    %c0_5 = arith.constant 0 : index
    %5 = vector.load %arg9[%c0_4, %c0_5] : memref<8x32xf32, #tpu.memory_space<vmem>>, vector<8x32xf32>
    %c0_i32_6 = arith.constant 0 : i32
    %c8_i32 = arith.constant 8 : i32
    %6 = arith.muli %c0_i32_6, %c8_i32 : i32
    %7 = tpu.assume_multiple %6, 8 : i32
    %8 = arith.index_cast %7 : i32 to index
    %c0_7 = arith.constant 0 : index
    %9 = vector.load %arg1[%8, %c0_7] : memref<64x128xbf16, #tpu.memory_space<vmem>>, vector<8x128xbf16>
    %10 = arith.extf %9 : vector<8x128xbf16> to vector<8x128xf32>
    %11 = arith.truncf %4 : vector<8x32xf32> to vector<8x32xbf16>
    %cst = arith.constant dense<0.000000e+00> : vector<8x128xf32>
    %12 = tpu.matmul %11, %3, %cst {dimension_numbers = #tpu.dot_dimension_numbers<[1], [0], [0], [1], [0, 0, 1, 1], [], []>} : vector<8x32xbf16>, vector<32x128xbf16>, vector<8x128xf32> -> vector<8x128xf32>
    %13 = arith.addf %10, %12 : vector<8x128xf32>
    %14 = vector.extract_strided_slice %13 {offsets = [0, 0], sizes = [8, 96], strides = [1, 1]} : vector<8x128xf32> to vector<8x96xf32>
    %15 = arith.negf %14 : vector<8x96xf32>
    %16 = math.exp %15 : vector<8x96xf32>
    %cst_8 = arith.constant 1.000000e+00 : f32
    %17 = vector.broadcast %cst_8 : f32 to vector<8x96xf32>
    %18 = arith.addf %17, %16 : vector<8x96xf32>
    %19 = arith.divf %17, %18 : vector<8x96xf32>
    %20 = vector.extract_strided_slice %13 {offsets = [0, 96], sizes = [8, 32], strides = [1, 1]} : vector<8x128xf32> to vector<8x32xf32>
    %21 = math.tanh %20 : vector<8x32xf32>
    %22 = vector.extract_strided_slice %19 {offsets = [0, 0], sizes = [8, 32], strides = [1, 1]} : vector<8x96xf32> to vector<8x32xf32>
    %23 = vector.extract_strided_slice %19 {offsets = [0, 32], sizes = [8, 32], strides = [1, 1]} : vector<8x96xf32> to vector<8x32xf32>
    %24 = vector.extract_strided_slice %19 {offsets = [0, 64], sizes = [8, 32], strides = [1, 1]} : vector<8x96xf32> to vector<8x32xf32>
    %25 = arith.mulf %23, %5 : vector<8x32xf32>
    %26 = arith.mulf %22, %21 : vector<8x32xf32>
    %27 = arith.addf %25, %26 : vector<8x32xf32>
    %28 = math.tanh %27 : vector<8x32xf32>
    %29 = arith.mulf %24, %28 : vector<8x32xf32>
    %30 = arith.index_cast %7 : i32 to index
    %c0_9 = arith.constant 0 : index
    %31 = vector.load %arg10[%30, %c0_9] : memref<64x32xf32, #tpu.memory_space<vmem>>, vector<8x32xf32>
    tpu.vector_store %arg10[%30, %c0_9], %29 {strides = array<i32>} : memref<64x32xf32, #tpu.memory_space<vmem>>, vector<8x32xf32>,
    %c1_i32 = arith.constant 1 : i32
    %c8_i32_10 = arith.constant 8 : i32
    %32 = arith.muli %c1_i32, %c8_i32_10 : i32
    %33 = tpu.assume_multiple %32, 8 : i32
    %34 = arith.index_cast %33 : i32 to index
    %c0_11 = arith.constant 0 : index
    %35 = vector.load %arg1[%34, %c0_11] : memref<64x128xbf16, #tpu.memory_space<vmem>>, vector<8x128xbf16>
    %36 = arith.extf %35 : vector<8x128xbf16> to vector<8x128xf32>
    %37 = arith.truncf %29 : vector<8x32xf32> to vector<8x32xbf16>
    %cst_12 = arith.constant dense<0.000000e+00> : vector<8x128xf32>
    %38 = tpu.matmul %37, %3, %cst_12 {dimension_numbers = #tpu.dot_dimension_numbers<[1], [0], [0], [1], [0, 0, 1, 1], [], []>} : vector<8x32xbf16>, vector<32x128xbf16>, vector<8x128xf32> -> vector<8x128xf32>
    %39 = arith.addf %36, %38 : vector<8x128xf32>
    %40 = vector.extract_strided_slice %39 {offsets = [0, 0], sizes = [8, 96], strides = [1, 1]} : vector<8x128xf32> to vector<8x96xf32>
    %41 = arith.negf %40 : vector<8x96xf32>
    %42 = math.exp %41 : vector<8x96xf32>
    %cst_13 = arith.constant 1.000000e+00 : f32
    %43 = vector.broadcast %cst_13 : f32 to vector<8x96xf32>
    %44 = arith.addf %43, %42 : vector<8x96xf32>
    %45 = arith.divf %43, %44 : vector<8x96xf32>
    %46 = vector.extract_strided_slice %39 {offsets = [0, 96], sizes = [8, 32], strides = [1, 1]} : vector<8x128xf32> to vector<8x32xf32>
    %47 = math.tanh %46 : vector<8x32xf32>
    %48 = vector.extract_strided_slice %45 {offsets = [0, 0], sizes = [8, 32], strides = [1, 1]} : vector<8x96xf32> to vector<8x32xf32>
    %49 = vector.extract_strided_slice %45 {offsets = [0, 32], sizes = [8, 32], strides = [1, 1]} : vector<8x96xf32> to vector<8x32xf32>
    %50 = vector.extract_strided_slice %45 {offsets = [0, 64], sizes = [8, 32], strides = [1, 1]} : vector<8x96xf32> to vector<8x32xf32>
    %51 = arith.mulf %49, %27 : vector<8x32xf32>
    %52 = arith.mulf %48, %47 : vector<8x32xf32>
    %53 = arith.addf %51, %52 : vector<8x32xf32>
    %54 = math.tanh %53 : vector<8x32xf32>
    %55 = arith.mulf %50, %54 : vector<8x32xf32>
    %56 = arith.index_cast %33 : i32 to index
    %c0_14 = arith.constant 0 : index
    %57 = vector.load %arg10[%56, %c0_14] : memref<64x32xf32, #tpu.memory_space<vmem>>, vector<8x32xf32>
    tpu.vector_store %arg10[%56, %c0_14], %55 {strides = array<i32>} : memref<64x32xf32, #tpu.memory_space<vmem>>, vector<8x32xf32>,
    %c2_i32 = arith.constant 2 : i32
    %c8_i32_15 = arith.constant 8 : i32
    %58 = arith.muli %c2_i32, %c8_i32_15 : i32
    %59 = tpu.assume_multiple %58, 8 : i32
    %60 = arith.index_cast %59 : i32 to index
    %c0_16 = arith.constant 0 : index
    %61 = vector.load %arg1[%60, %c0_16] : memref<64x128xbf16, #tpu.memory_space<vmem>>, vector<8x128xbf16>
    %62 = arith.extf %61 : vector<8x128xbf16> to vector<8x128xf32>
    %63 = arith.truncf %55 : vector<8x32xf32> to vector<8x32xbf16>
    %cst_17 = arith.constant dense<0.000000e+00> : vector<8x128xf32>
    %64 = tpu.matmul %63, %3, %cst_17 {dimension_numbers = #tpu.dot_dimension_numbers<[1], [0], [0], [1], [0, 0, 1, 1], [], []>} : vector<8x32xbf16>, vector<32x128xbf16>, vector<8x128xf32> -> vector<8x128xf32>
    %65 = arith.addf %62, %64 : vector<8x128xf32>
    %66 = vector.extract_strided_slice %65 {offsets = [0, 0], sizes = [8, 96], strides = [1, 1]} : vector<8x128xf32> to vector<8x96xf32>
    %67 = arith.negf %66 : vector<8x96xf32>
    %68 = math.exp %67 : vector<8x96xf32>
    %cst_18 = arith.constant 1.000000e+00 : f32
    %69 = vector.broadcast %cst_18 : f32 to vector<8x96xf32>
    %70 = arith.addf %69, %68 : vector<8x96xf32>
    %71 = arith.divf %69, %70 : vector<8x96xf32>
    %72 = vector.extract_strided_slice %65 {offsets = [0, 96], sizes = [8, 32], strides = [1, 1]} : vector<8x128xf32> to vector<8x32xf32>
    %73 = math.tanh %72 : vector<8x32xf32>
    %74 = vector.extract_strided_slice %71 {offsets = [0, 0], sizes = [8, 32], strides = [1, 1]} : vector<8x96xf32> to vector<8x32xf32>
    %75 = vector.extract_strided_slice %71 {offsets = [0, 32], sizes = [8, 32], strides = [1, 1]} : vector<8x96xf32> to vector<8x32xf32>
    %76 = vector.extract_strided_slice %71 {offsets = [0, 64], sizes = [8, 32], strides = [1, 1]} : vector<8x96xf32> to vector<8x32xf32>
    %77 = arith.mulf %75, %53 : vector<8x32xf32>
    %78 = arith.mulf %74, %73 : vector<8x32xf32>
    %79 = arith.addf %77, %78 : vector<8x32xf32>
    %80 = math.tanh %79 : vector<8x32xf32>
    %81 = arith.mulf %76, %80 : vector<8x32xf32>
    %82 = arith.index_cast %59 : i32 to index
    %c0_19 = arith.constant 0 : index
    %83 = vector.load %arg10[%82, %c0_19] : memref<64x32xf32, #tpu.memory_space<vmem>>, vector<8x32xf32>
    tpu.vector_store %arg10[%82, %c0_19], %81 {strides = array<i32>} : memref<64x32xf32, #tpu.memory_space<vmem>>, vector<8x32xf32>,
    %c3_i32 = arith.constant 3 : i32
    %c8_i32_20 = arith.constant 8 : i32
    %84 = arith.muli %c3_i32, %c8_i32_20 : i32
    %85 = tpu.assume_multiple %84, 8 : i32
    %86 = arith.index_cast %85 : i32 to index
    %c0_21 = arith.constant 0 : index
    %87 = vector.load %arg1[%86, %c0_21] : memref<64x128xbf16, #tpu.memory_space<vmem>>, vector<8x128xbf16>
    %88 = arith.extf %87 : vector<8x128xbf16> to vector<8x128xf32>
    %89 = arith.truncf %81 : vector<8x32xf32> to vector<8x32xbf16>
    %cst_22 = arith.constant dense<0.000000e+00> : vector<8x128xf32>
    %90 = tpu.matmul %89, %3, %cst_22 {dimension_numbers = #tpu.dot_dimension_numbers<[1], [0], [0], [1], [0, 0, 1, 1], [], []>} : vector<8x32xbf16>, vector<32x128xbf16>, vector<8x128xf32> -> vector<8x128xf32>
    %91 = arith.addf %88, %90 : vector<8x128xf32>
    %92 = vector.extract_strided_slice %91 {offsets = [0, 0], sizes = [8, 96], strides = [1, 1]} : vector<8x128xf32> to vector<8x96xf32>
    %93 = arith.negf %92 : vector<8x96xf32>
    %94 = math.exp %93 : vector<8x96xf32>
    %cst_23 = arith.constant 1.000000e+00 : f32
    %95 = vector.broadcast %cst_23 : f32 to vector<8x96xf32>
    %96 = arith.addf %95, %94 : vector<8x96xf32>
    %97 = arith.divf %95, %96 : vector<8x96xf32>
    %98 = vector.extract_strided_slice %91 {offsets = [0, 96], sizes = [8, 32], strides = [1, 1]} : vector<8x128xf32> to vector<8x32xf32>
    %99 = math.tanh %98 : vector<8x32xf32>
    %100 = vector.extract_strided_slice %97 {offsets = [0, 0], sizes = [8, 32], strides = [1, 1]} : vector<8x96xf32> to vector<8x32xf32>
    %101 = vector.extract_strided_slice %97 {offsets = [0, 32], sizes = [8, 32], strides = [1, 1]} : vector<8x96xf32> to vector<8x32xf32>
    %102 = vector.extract_strided_slice %97 {offsets = [0, 64], sizes = [8, 32], strides = [1, 1]} : vector<8x96xf32> to vector<8x32xf32>
    %103 = arith.mulf %101, %79 : vector<8x32xf32>
    %104 = arith.mulf %100, %99 : vector<8x32xf32>
    %105 = arith.addf %103, %104 : vector<8x32xf32>
    %106 = math.tanh %105 : vector<8x32xf32>
    %107 = arith.mulf %102, %106 : vector<8x32xf32>
    %108 = arith.index_cast %85 : i32 to index
    %c0_24 = arith.constant 0 : index
    %109 = vector.load %arg10[%108, %c0_24] : memref<64x32xf32, #tpu.memory_space<vmem>>, vector<8x32xf32>
    tpu.vector_store %arg10[%108, %c0_24], %107 {strides = array<i32>} : memref<64x32xf32, #tpu.memory_space<vmem>>, vector<8x32xf32>,
    %c4_i32 = arith.constant 4 : i32
    %c8_i32_25 = arith.constant 8 : i32
    %110 = arith.muli %c4_i32, %c8_i32_25 : i32
    %111 = tpu.assume_multiple %110, 8 : i32
    %112 = arith.index_cast %111 : i32 to index
    %c0_26 = arith.constant 0 : index
    %113 = vector.load %arg1[%112, %c0_26] : memref<64x128xbf16, #tpu.memory_space<vmem>>, vector<8x128xbf16>
    %114 = arith.extf %113 : vector<8x128xbf16> to vector<8x128xf32>
    %115 = arith.truncf %107 : vector<8x32xf32> to vector<8x32xbf16>
    %cst_27 = arith.constant dense<0.000000e+00> : vector<8x128xf32>
    %116 = tpu.matmul %115, %3, %cst_27 {dimension_numbers = #tpu.dot_dimension_numbers<[1], [0], [0], [1], [0, 0, 1, 1], [], []>} : vector<8x32xbf16>, vector<32x128xbf16>, vector<8x128xf32> -> vector<8x128xf32>
    %117 = arith.addf %114, %116 : vector<8x128xf32>
    %118 = vector.extract_strided_slice %117 {offsets = [0, 0], sizes = [8, 96], strides = [1, 1]} : vector<8x128xf32> to vector<8x96xf32>
    %119 = arith.negf %118 : vector<8x96xf32>
    %120 = math.exp %119 : vector<8x96xf32>
    %cst_28 = arith.constant 1.000000e+00 : f32
    %121 = vector.broadcast %cst_28 : f32 to vector<8x96xf32>
    %122 = arith.addf %121, %120 : vector<8x96xf32>
    %123 = arith.divf %121, %122 : vector<8x96xf32>
    %124 = vector.extract_strided_slice %117 {offsets = [0, 96], sizes = [8, 32], strides = [1, 1]} : vector<8x128xf32> to vector<8x32xf32>
    %125 = math.tanh %124 : vector<8x32xf32>
    %126 = vector.extract_strided_slice %123 {offsets = [0, 0], sizes = [8, 32], strides = [1, 1]} : vector<8x96xf32> to vector<8x32xf32>
    %127 = vector.extract_strided_slice %123 {offsets = [0, 32], sizes = [8, 32], strides = [1, 1]} : vector<8x96xf32> to vector<8x32xf32>
    %128 = vector.extract_strided_slice %123 {offsets = [0, 64], sizes = [8, 32], strides = [1, 1]} : vector<8x96xf32> to vector<8x32xf32>
    %129 = arith.mulf %127, %105 : vector<8x32xf32>
    %130 = arith.mulf %126, %125 : vector<8x32xf32>
    %131 = arith.addf %129, %130 : vector<8x32xf32>
    %132 = math.tanh %131 : vector<8x32xf32>
    %133 = arith.mulf %128, %132 : vector<8x32xf32>
    %134 = arith.index_cast %111 : i32 to index
    %c0_29 = arith.constant 0 : index
    %135 = vector.load %arg10[%134, %c0_29] : memref<64x32xf32, #tpu.memory_space<vmem>>, vector<8x32xf32>
    tpu.vector_store %arg10[%134, %c0_29], %133 {strides = array<i32>} : memref<64x32xf32, #tpu.memory_space<vmem>>, vector<8x32xf32>,
    %c5_i32 = arith.constant 5 : i32
    %c8_i32_30 = arith.constant 8 : i32
    %136 = arith.muli %c5_i32, %c8_i32_30 : i32
    %137 = tpu.assume_multiple %136, 8 : i32
    %138 = arith.index_cast %137 : i32 to index
    %c0_31 = arith.constant 0 : index
    %139 = vector.load %arg1[%138, %c0_31] : memref<64x128xbf16, #tpu.memory_space<vmem>>, vector<8x128xbf16>
    %140 = arith.extf %139 : vector<8x128xbf16> to vector<8x128xf32>
    %141 = arith.truncf %133 : vector<8x32xf32> to vector<8x32xbf16>
    %cst_32 = arith.constant dense<0.000000e+00> : vector<8x128xf32>
    %142 = tpu.matmul %141, %3, %cst_32 {dimension_numbers = #tpu.dot_dimension_numbers<[1], [0], [0], [1], [0, 0, 1, 1], [], []>} : vector<8x32xbf16>, vector<32x128xbf16>, vector<8x128xf32> -> vector<8x128xf32>
    %143 = arith.addf %140, %142 : vector<8x128xf32>
    %144 = vector.extract_strided_slice %143 {offsets = [0, 0], sizes = [8, 96], strides = [1, 1]} : vector<8x128xf32> to vector<8x96xf32>
    %145 = arith.negf %144 : vector<8x96xf32>
    %146 = math.exp %145 : vector<8x96xf32>
    %cst_33 = arith.constant 1.000000e+00 : f32
    %147 = vector.broadcast %cst_33 : f32 to vector<8x96xf32>
    %148 = arith.addf %147, %146 : vector<8x96xf32>
    %149 = arith.divf %147, %148 : vector<8x96xf32>
    %150 = vector.extract_strided_slice %143 {offsets = [0, 96], sizes = [8, 32], strides = [1, 1]} : vector<8x128xf32> to vector<8x32xf32>
    %151 = math.tanh %150 : vector<8x32xf32>
    %152 = vector.extract_strided_slice %149 {offsets = [0, 0], sizes = [8, 32], strides = [1, 1]} : vector<8x96xf32> to vector<8x32xf32>
    %153 = vector.extract_strided_slice %149 {offsets = [0, 32], sizes = [8, 32], strides = [1, 1]} : vector<8x96xf32> to vector<8x32xf32>
    %154 = vector.extract_strided_slice %149 {offsets = [0, 64], sizes = [8, 32], strides = [1, 1]} : vector<8x96xf32> to vector<8x32xf32>
    %155 = arith.mulf %153, %131 : vector<8x32xf32>
    %156 = arith.mulf %152, %151 : vector<8x32xf32>
    %157 = arith.addf %155, %156 : vector<8x32xf32>
    %158 = math.tanh %157 : vector<8x32xf32>
    %159 = arith.mulf %154, %158 : vector<8x32xf32>
    %160 = arith.index_cast %137 : i32 to index
    %c0_34 = arith.constant 0 : index
    %161 = vector.load %arg10[%160, %c0_34] : memref<64x32xf32, #tpu.memory_space<vmem>>, vector<8x32xf32>
    tpu.vector_store %arg10[%160, %c0_34], %159 {strides = array<i32>} : memref<64x32xf32, #tpu.memory_space<vmem>>, vector<8x32xf32>,
    %c6_i32 = arith.constant 6 : i32
    %c8_i32_35 = arith.constant 8 : i32
    %162 = arith.muli %c6_i32, %c8_i32_35 : i32
    %163 = tpu.assume_multiple %162, 8 : i32
    %164 = arith.index_cast %163 : i32 to index
    %c0_36 = arith.constant 0 : index
    %165 = vector.load %arg1[%164, %c0_36] : memref<64x128xbf16, #tpu.memory_space<vmem>>, vector<8x128xbf16>
    %166 = arith.extf %165 : vector<8x128xbf16> to vector<8x128xf32>
    %167 = arith.truncf %159 : vector<8x32xf32> to vector<8x32xbf16>
    %cst_37 = arith.constant dense<0.000000e+00> : vector<8x128xf32>
    %168 = tpu.matmul %167, %3, %cst_37 {dimension_numbers = #tpu.dot_dimension_numbers<[1], [0], [0], [1], [0, 0, 1, 1], [], []>} : vector<8x32xbf16>, vector<32x128xbf16>, vector<8x128xf32> -> vector<8x128xf32>
    %169 = arith.addf %166, %168 : vector<8x128xf32>
    %170 = vector.extract_strided_slice %169 {offsets = [0, 0], sizes = [8, 96], strides = [1, 1]} : vector<8x128xf32> to vector<8x96xf32>
    %171 = arith.negf %170 : vector<8x96xf32>
    %172 = math.exp %171 : vector<8x96xf32>
    %cst_38 = arith.constant 1.000000e+00 : f32
    %173 = vector.broadcast %cst_38 : f32 to vector<8x96xf32>
    %174 = arith.addf %173, %172 : vector<8x96xf32>
    %175 = arith.divf %173, %174 : vector<8x96xf32>
    %176 = vector.extract_strided_slice %169 {offsets = [0, 96], sizes = [8, 32], strides = [1, 1]} : vector<8x128xf32> to vector<8x32xf32>
    %177 = math.tanh %176 : vector<8x32xf32>
    %178 = vector.extract_strided_slice %175 {offsets = [0, 0], sizes = [8, 32], strides = [1, 1]} : vector<8x96xf32> to vector<8x32xf32>
    %179 = vector.extract_strided_slice %175 {offsets = [0, 32], sizes = [8, 32], strides = [1, 1]} : vector<8x96xf32> to vector<8x32xf32>
    %180 = vector.extract_strided_slice %175 {offsets = [0, 64], sizes = [8, 32], strides = [1, 1]} : vector<8x96xf32> to vector<8x32xf32>
    %181 = arith.mulf %179, %157 : vector<8x32xf32>
    %182 = arith.mulf %178, %177 : vector<8x32xf32>
    %183 = arith.addf %181, %182 : vector<8x32xf32>
    %184 = math.tanh %183 : vector<8x32xf32>
    %185 = arith.mulf %180, %184 : vector<8x32xf32>
    %186 = arith.index_cast %163 : i32 to index
    %c0_39 = arith.constant 0 : index
    %187 = vector.load %arg10[%186, %c0_39] : memref<64x32xf32, #tpu.memory_space<vmem>>, vector<8x32xf32>
    tpu.vector_store %arg10[%186, %c0_39], %185 {strides = array<i32>} : memref<64x32xf32, #tpu.memory_space<vmem>>, vector<8x32xf32>,
    %c7_i32 = arith.constant 7 : i32
    %c8_i32_40 = arith.constant 8 : i32
    %188 = arith.muli %c7_i32, %c8_i32_40 : i32
    %189 = tpu.assume_multiple %188, 8 : i32
    %190 = arith.index_cast %189 : i32 to index
    %c0_41 = arith.constant 0 : index
    %191 = vector.load %arg1[%190, %c0_41] : memref<64x128xbf16, #tpu.memory_space<vmem>>, vector<8x128xbf16>
    %192 = arith.extf %191 : vector<8x128xbf16> to vector<8x128xf32>
    %193 = arith.truncf %185 : vector<8x32xf32> to vector<8x32xbf16>
    %cst_42 = arith.constant dense<0.000000e+00> : vector<8x128xf32>
    %194 = tpu.matmul %193, %3, %cst_42 {dimension_numbers = #tpu.dot_dimension_numbers<[1], [0], [0], [1], [0, 0, 1, 1], [], []>} : vector<8x32xbf16>, vector<32x128xbf16>, vector<8x128xf32> -> vector<8x128xf32>
    %195 = arith.addf %192, %194 : vector<8x128xf32>
    %196 = vector.extract_strided_slice %195 {offsets = [0, 0], sizes = [8, 96], strides = [1, 1]} : vector<8x128xf32> to vector<8x96xf32>
    %197 = arith.negf %196 : vector<8x96xf32>
    %198 = math.exp %197 : vector<8x96xf32>
    %cst_43 = arith.constant 1.000000e+00 : f32
    %199 = vector.broadcast %cst_43 : f32 to vector<8x96xf32>
    %200 = arith.addf %199, %198 : vector<8x96xf32>
    %201 = arith.divf %199, %200 : vector<8x96xf32>
    %202 = vector.extract_strided_slice %195 {offsets = [0, 96], sizes = [8, 32], strides = [1, 1]} : vector<8x128xf32> to vector<8x32xf32>
    %203 = math.tanh %202 : vector<8x32xf32>
    %204 = vector.extract_strided_slice %201 {offsets = [0, 0], sizes = [8, 32], strides = [1, 1]} : vector<8x96xf32> to vector<8x32xf32>
    %205 = vector.extract_strided_slice %201 {offsets = [0, 32], sizes = [8, 32], strides = [1, 1]} : vector<8x96xf32> to vector<8x32xf32>
    %206 = vector.extract_strided_slice %201 {offsets = [0, 64], sizes = [8, 32], strides = [1, 1]} : vector<8x96xf32> to vector<8x32xf32>
    %207 = arith.mulf %205, %183 : vector<8x32xf32>
    %208 = arith.mulf %204, %203 : vector<8x32xf32>
    %209 = arith.addf %207, %208 : vector<8x32xf32>
    %210 = math.tanh %209 : vector<8x32xf32>
    %211 = arith.mulf %206, %210 : vector<8x32xf32>
    %212 = arith.index_cast %189 : i32 to index
    %c0_44 = arith.constant 0 : index
    %213 = vector.load %arg10[%212, %c0_44] : memref<64x32xf32, #tpu.memory_space<vmem>>, vector<8x32xf32>
    tpu.vector_store %arg10[%212, %c0_44], %211 {strides = array<i32>} : memref<64x32xf32, #tpu.memory_space<vmem>>, vector<8x32xf32>,
    %c8_i32_45 = arith.constant 8 : i32
    %c0_46 = arith.constant 0 : index
    %c0_47 = arith.constant 0 : index
    %214 = vector.load %arg8[%c0_46, %c0_47] : memref<8x32xf32, #tpu.memory_space<vmem>>, vector<8x32xf32>
    tpu.vector_store %arg8[%c0_46, %c0_47], %211 {strides = array<i32>} : memref<8x32xf32, #tpu.memory_space<vmem>>, vector<8x32xf32>,
    %c0_48 = arith.constant 0 : index
    %c0_49 = arith.constant 0 : index
    %215 = vector.load %arg9[%c0_48, %c0_49] : memref<8x32xf32, #tpu.memory_space<vmem>>, vector<8x32xf32>
    tpu.vector_store %arg9[%c0_48, %c0_49], %209 {strides = array<i32>} : memref<8x32xf32, #tpu.memory_space<vmem>>, vector<8x32xf32>,
    %c0_50 = arith.constant 0 : index
    %c0_51 = arith.constant 0 : index
    %216 = vector.load %arg10[%c0_50, %c0_51] : memref<64x32xf32, #tpu.memory_space<vmem>>, vector<64x32xf32>
    %cst_52 = arith.constant dense<0.000000e+00> : vector<64xf32>
    %217 = vector.multi_reduction <add>, %216, %cst_52 [1] : vector<64x32xf32> to vector<64xf32>
    %218 = vector.shape_cast %217 : vector<64xf32> to vector<64x1xf32>
    %cst_53 = arith.constant 3.200000e+01 : f32
    %219 = vector.broadcast %cst_53 : f32 to vector<64x1xf32>
    %220 = arith.divf %218, %219 : vector<64x1xf32>
    %221 = vector.broadcast %220 : vector<64x1xf32> to vector<64x32xf32>
    %222 = arith.subf %216, %221 : vector<64x32xf32>
    %223 = arith.mulf %222, %222 : vector<64x32xf32>
    %cst_54 = arith.constant dense<0.000000e+00> : vector<64xf32>
    %224 = vector.multi_reduction <add>, %223, %cst_54 [1] : vector<64x32xf32> to vector<64xf32>
    %225 = vector.shape_cast %224 : vector<64xf32> to vector<64x1xf32>
    %cst_55 = arith.constant 3.200000e+01 : f32
    %226 = vector.broadcast %cst_55 : f32 to vector<64x1xf32>
    %227 = arith.divf %225, %226 : vector<64x1xf32>
    %228 = vector.broadcast %220 : vector<64x1xf32> to vector<64x32xf32>
    %229 = arith.subf %216, %228 : vector<64x32xf32>
    %cst_56 = arith.constant 9.99999974E-6 : f32
    %230 = vector.broadcast %cst_56 : f32 to vector<64x1xf32>
    %231 = arith.addf %227, %230 : vector<64x1xf32>
    %232 = math.rsqrt %231 : vector<64x1xf32>
    %233 = vector.broadcast %232 : vector<64x1xf32> to vector<64x32xf32>
    %234 = arith.mulf %229, %233 : vector<64x32xf32>
    %c0_57 = arith.constant 0 : index
    %c0_58 = arith.constant 0 : index
    %235 = vector.load %arg3[%c0_57, %c0_58] : memref<1x32xf32, #tpu.memory_space<vmem>>, vector<1x32xf32>
    %236 = vector.broadcast %235 : vector<1x32xf32> to vector<64x32xf32>
    %237 = arith.mulf %234, %236 : vector<64x32xf32>
    %c0_59 = arith.constant 0 : index
    %c0_60 = arith.constant 0 : index
    %238 = vector.load %arg4[%c0_59, %c0_60] : memref<1x32xf32, #tpu.memory_space<vmem>>, vector<1x32xf32>
    %239 = vector.broadcast %238 : vector<1x32xf32> to vector<64x32xf32>
    %240 = arith.addf %237, %239 : vector<64x32xf32>
    %241 = arith.truncf %240 : vector<64x32xf32> to vector<64x32xbf16>
    %c0_61 = arith.constant 0 : index
    %c0_62 = arith.constant 0 : index
    %242 = vector.load %arg5[%c0_61, %c0_62] : memref<32x8xbf16, #tpu.memory_space<vmem>>, vector<32x8xbf16>
    %cst_63 = arith.constant dense<0.000000e+00> : vector<64x8xf32>
    %243 = tpu.matmul %241, %242, %cst_63 {dimension_numbers = #tpu.dot_dimension_numbers<[1], [0], [0], [1], [0, 0, 1, 1], [], []>} : vector<64x32xbf16>, vector<32x8xbf16>, vector<64x8xf32> -> vector<64x8xf32>
    %c0_64 = arith.constant 0 : index
    %c0_65 = arith.constant 0 : index
    %244 = vector.load %arg6[%c0_64, %c0_65] : memref<1x8xf32, #tpu.memory_space<vmem>>, vector<1x8xf32>
    %245 = vector.broadcast %244 : vector<1x8xf32> to vector<64x8xf32>
    %246 = arith.addf %243, %245 : vector<64x8xf32>
    %247 = arith.negf %246 : vector<64x8xf32>
    %248 = math.exp %247 : vector<64x8xf32>
    %cst_66 = arith.constant 1.000000e+00 : f32
    %249 = vector.broadcast %cst_66 : f32 to vector<64x8xf32>
    %250 = arith.addf %249, %248 : vector<64x8xf32>
    %251 = arith.divf %249, %250 : vector<64x8xf32>
    %c0_67 = arith.constant 0 : index
    %c0_68 = arith.constant 0 : index
    %252 = vector.load %arg7[%c0_67, %c0_68] : memref<64x8xf32, #tpu.memory_space<vmem>>, vector<64x8xf32>
    tpu.vector_store %arg7[%c0_67, %c0_68], %251 {strides = array<i32>} : memref<64x8xf32, #tpu.memory_space<vmem>>, vector<64x8xf32>,
    return
  }
  func.func @transform_0(%arg0: i32) -> (i32, i32) {
    %c0_i32 = arith.constant 0 : i32
    %c0_i32_0 = arith.constant 0 : i32
    return %arg0, %c0_i32 : i32, i32
  }
  func.func @transform_1(%arg0: i32) -> (i32, i32) {
    %c0_i32 = arith.constant 0 : i32
    %c0_i32_0 = arith.constant 0 : i32
    %c0_i32_1 = arith.constant 0 : i32
    return %c0_i32, %c0_i32_0 : i32, i32
  }
  func.func @transform_2(%arg0: i32) -> (i32, i32) {
    %c0_i32 = arith.constant 0 : i32
    %c0_i32_0 = arith.constant 0 : i32
    %c0_i32_1 = arith.constant 0 : i32
    return %c0_i32, %c0_i32_0 : i32, i32
  }
  func.func @transform_3(%arg0: i32) -> (i32, i32) {
    %c0_i32 = arith.constant 0 : i32
    %c0_i32_0 = arith.constant 0 : i32
    %c0_i32_1 = arith.constant 0 : i32
    return %c0_i32, %c0_i32_0 : i32, i32
  }
  func.func @transform_4(%arg0: i32) -> (i32, i32) {
    %c0_i32 = arith.constant 0 : i32
    %c0_i32_0 = arith.constant 0 : i32
    %c0_i32_1 = arith.constant 0 : i32
    return %c0_i32, %c0_i32_0 : i32, i32
  }
  func.func @transform_5(%arg0: i32) -> (i32, i32) {
    %c0_i32 = arith.constant 0 : i32
    %c0_i32_0 = arith.constant 0 : i32
    %c0_i32_1 = arith.constant 0 : i32
    return %c0_i32, %c0_i32_0 : i32, i32
  }
  func.func @transform_6(%arg0: i32) -> (i32, i32) {
    %c0_i32 = arith.constant 0 : i32
    %c0_i32_0 = arith.constant 0 : i32
    return %arg0, %c0_i32 : i32, i32
  }
}

</mosaic_0001>

<llo_original>
// kernel: lstm_model_forward.2
$region0: #{lstm_model_forward.2}
  #allocation0 [shape = 'u32[]', space=smem, size = 0x4, offset = 0x4, fixed_abs, tag = 'smem constant byte address 0x4 - core index']
  #allocation1 [shape = 'u32[144,128]{1,0:T(1,128)}', space=vmem, size = 0x12000, scoped, tag = 'internal scratch']
  %s0 = inlined_call_operand.vmem [shape: f32[64,16], index: 0, kind: input, shape index: {}]
  %s1 = inlined_call_operand.vmem [shape: bf16[16,128], index: 1, kind: input, shape index: {}]
  %s2 = inlined_call_operand.vmem [shape: f32[1,128], index: 2, kind: input, shape index: {}]
  %s3 = inlined_call_operand.vmem [shape: bf16[64,128], index: 3, kind: output, shape index: {}]
  %s4 = sld [smem:[#allocation0]]
  $region22: #{lstm_model_forward.2} parent=0
    _
  %s6 = ssub.s32 1, %s4
  %s7 = scalar_select 0, %s6, %s4
  // Predicated region
  $region2: #{lstm_model_forward.2} parent=0 // pred_check
    _
  $region3: #{lstm_model_forward.2} parent=0 // pred_check_branch
    %9 = sbr.rel (0) target = $region5
  $region4: #{lstm_model_forward.2} parent=0 // pred_region
    _
  $region5: #{lstm_model_forward.2} parent=0 // pred_fallthru
    _
  // Predicated region
  $region6: #{lstm_model_forward.2} parent=0 // pred_check
    _
  $region7: #{lstm_model_forward.2} parent=0 // pred_check_branch
    %11 = sbr.rel (0) target = $region9
  $region8: #{lstm_model_forward.2} parent=0 // pred_region
    _
  $region9: #{lstm_model_forward.2} parent=0 // pred_fallthru
    _
  // Predicated region
  $region10: #{lstm_model_forward.2} parent=0 // pred_check
    _
  $region11: #{lstm_model_forward.2} parent=0 // pred_check_branch
    %13 = sbr.rel (0) target = $region13
  $region12: #{lstm_model_forward.2} parent=0 // pred_region
    _
  $region13: #{lstm_model_forward.2} parent=0 // pred_fallthru
    _
  %v15 = vld [vmem:[%s0] sm:$0xff]
  %v16 = vld [vmem:[%s0 + $0x8] sm:$0xff]
  %v17 = vld [vmem:[%s0 + $0x10] sm:$0xff]
  %v18 = vld [vmem:[%s0 + $0x18] sm:$0xff]
  %v19 = vld [vmem:[%s0 + $0x20] sm:$0xff]
  %v20 = vld [vmem:[%s0 + $0x28] sm:$0xff]
  %v21 = vld [vmem:[%s0 + $0x30] sm:$0xff]
  %v22 = vld [vmem:[%s0 + $0x38] sm:$0xff]
  %v23 = vpack.c.bf16 %v16, %v15
  %v24 = vpack.c.bf16 %v18, %v17
  %v25 = vpack.c.bf16 %v20, %v19
  %v26 = vpack.c.bf16 %v22, %v21
  %v27 = vld [vmem:[%s1] sm:$0xf]
  %v28 = vld [vmem:[%s1 + $0x4] sm:$0xf]
  %v29 = vld [vmem:[%s2] sm:$0x1]
  %v31 = vlaneseq
  %v32 = vshrl.u32 %v31, 7
  %v33 = vsub.s32 0, %v32
  %v34 = vrot.slane %v29, %v33
  %v38 = vunpack.c.l.b16 %v27
  %v39 = vunpack.c.l.b16 %v28
  %v40 = vpack.c.b16 %v39, %v38
  %vm42 = vcmask 130048
  %v44 = vsel %vm42, %v23, 0
  %v47 = vsel %vm42, %v24, 0
  %v50 = vsel %vm42, %v25, 0
  %v53 = vsel %vm42, %v26, 0
  %55 = vmatprep.subr.bf16.mxu0 0
  %56 = vmatpush1.bf16.msra.mxu0 %v40
  %57 = vmatprep.subr.bf16.mxu0 0
  %58 = vmatpush1.bf16.msra.mxu0 0
  %59 = vmatprep.subr.bf16.mxu0 0
  %60 = vmatpush1.bf16.msra.mxu0 0
  %61 = vmatprep.subr.bf16.mxu0 0
  %62 = vmatpush1.bf16.msra.mxu0 0
  %63 = vmatprep.subr.bf16.mxu0 0
  %64 = vmatpush1.bf16.msra.mxu0 0
  %65 = vmatprep.subr.bf16.mxu0 0
  %66 = vmatpush1.bf16.msra.mxu0 0
  %67 = vmatprep.subr.bf16.mxu0 0
  %68 = vmatpush1.bf16.msra.mxu0 0
  %69 = vmatprep.subr.bf16.mxu0 0
  %70 = vmatpush1.bf16.msra.mxu0 0
  %71 = vmatprep.subr.bf16.mxu0 0
  %72 = vmatpush1.bf16.msra.mxu0 0
  %73 = vmatprep.subr.bf16.mxu0 0
  %74 = vmatpush1.bf16.msra.mxu0 0
  %75 = vmatprep.subr.bf16.mxu0 0
  %76 = vmatpush1.bf16.msra.mxu0 0
  %77 = vmatprep.subr.bf16.mxu0 0
  %78 = vmatpush1.bf16.msra.mxu0 0
  %79 = vmatprep.subr.bf16.mxu0 0
  %80 = vmatpush1.bf16.msra.mxu0 0
  %81 = vmatprep.subr.bf16.mxu0 0
  %82 = vmatpush1.bf16.msra.mxu0 0
  %83 = vmatprep.subr.bf16.mxu0 0
  %84 = vmatpush1.bf16.msra.mxu0 0
  %85 = vmatprep.subr.bf16.mxu0 0
  %86 = vmatpush1.bf16.msra.mxu0 0
  %87 = vmatprep.mubr.bf16.mxu0 0
  %88 = vmatmul.mubr.bf16.gmra.mrb[0].mxu0 %v44
  %v89 = vpop.f32.mrb[0].mxu0
  %v90 = vadd.f32 %v34, %v89
  %v91 = vpop.f32.mrb[0].mxu0
  %v92 = vpop.f32.mrb[0].mxu0
  %v93 = vadd.f32 %v34, %v92
  %v94 = vpop.f32.mrb[0].mxu0
  %95 = vmatprep.mubr.bf16.mxu0 0
  %96 = vmatmul.mubr.bf16.gmra.mrb[0].mxu0 %v47
  %v97 = vpop.f32.mrb[0].mxu0
  %v98 = vadd.f32 %v34, %v97
  %v99 = vpop.f32.mrb[0].mxu0
  %v100 = vpop.f32.mrb[0].mxu0
  %v101 = vadd.f32 %v34, %v100
  %v102 = vpop.f32.mrb[0].mxu0
  %103 = vmatprep.mubr.bf16.mxu0 0
  %104 = vmatmul.mubr.bf16.gmra.mrb[0].mxu0 %v50
  %v105 = vpop.f32.mrb[0].mxu0
  %v106 = vadd.f32 %v34, %v105
  %v107 = vpop.f32.mrb[0].mxu0
  %v108 = vpop.f32.mrb[0].mxu0
  %v109 = vadd.f32 %v34, %v108
  %v110 = vpop.f32.mrb[0].mxu0
  %111 = vmatprep.mubr.bf16.mxu0 0
  %112 = vmatmul.mubr.bf16.gmra.mrb[0].mxu0 %v53
  %v113 = vpop.f32.mrb[0].mxu0
  %v114 = vadd.f32 %v34, %v113
  %v115 = vpop.f32.mrb[0].mxu0
  %v116 = vpop.f32.mrb[0].mxu0
  %v117 = vadd.f32 %v34, %v116
  %v118 = vpop.f32.mrb[0].mxu0
  %119 = vdwg.mxu0
  %v120 = vpack.c.bf16 %v93, %v90
  %v121 = vpack.c.bf16 %v101, %v98
  %v122 = vpack.c.bf16 %v109, %v106
  %v123 = vpack.c.bf16 %v117, %v114
  %v128 = vunpack.c.l.b16 %v120
  %v129 = vunpack.c.h.b16 %v120
  %v130 = vunpack.c.l.b16 %v121
  %v131 = vunpack.c.h.b16 %v121
  %v132 = vunpack.c.l.b16 %v122
  %v133 = vunpack.c.h.b16 %v122
  %v134 = vunpack.c.l.b16 %v123
  %v135 = vunpack.c.h.b16 %v123
  %v136 = vpack.c.b16 %v128, %v128
  %v137 = vpack.c.b16 %v129, %v129
  %v138 = vpack.c.b16 %v130, %v130
  %v139 = vpack.c.b16 %v131, %v131
  %v140 = vpack.c.b16 %v132, %v132
  %v141 = vpack.c.b16 %v133, %v133
  %v142 = vpack.c.b16 %v134, %v134
  %v143 = vpack.c.b16 %v135, %v135
  %152 = vst [vmem:[%s3] sm:$0xf] %v136
  %153 = vst [vmem:[%s3 + $0x4] sm:$0xf] %v137
  %154 = vst [vmem:[%s3 + $0x8] sm:$0xf] %v138
  %155 = vst [vmem:[%s3 + $0xc] sm:$0xf] %v139
  %156 = vst [vmem:[%s3 + $0x10] sm:$0xf] %v140
  %157 = vst [vmem:[%s3 + $0x14] sm:$0xf] %v141
  %158 = vst [vmem:[%s3 + $0x18] sm:$0xf] %v142
  %159 = vst [vmem:[%s3 + $0x1c] sm:$0xf] %v143
  // Predicated region
  $region14: #{lstm_model_forward.2} parent=0 // pred_check
    _
  $region15: #{lstm_model_forward.2} parent=0 // pred_check_branch
    %161 = sbr.rel (0) target = $region17
  $region16: #{lstm_model_forward.2} parent=0 // pred_region
    _
  $region17: #{lstm_model_forward.2} parent=0 // pred_fallthru
    _
  // Predicated region
  $region18: #{lstm_model_forward.2} parent=0 // pred_check
    _
  $region19: #{lstm_model_forward.2} parent=0 // pred_check_branch
    %163 = sbr.rel (0) target = $region21
  $region20: #{lstm_model_forward.2} parent=0 // pred_region
    _
  $region21: #{lstm_model_forward.2} parent=0 // pred_fallthru
    _

// kernel: lstm_model_forward.3
$region0: #{lstm_model_forward.3}
  #allocation0 [shape = 'u32[]', space=smem, size = 0x4, offset = 0x4, fixed_abs, tag = 'smem constant byte address 0x4 - core index']
  #allocation1 [shape = 'u32[144,128]{1,0:T(1,128)}', space=vmem, size = 0x12000, scoped, tag = 'internal scratch']
  #allocation2 [shape = 'f32[8,32]{1,0:T(8,128)}', space=vmem, size = 0x1000, scoped, tag = 'scratch operand']
  #allocation3 [shape = 'f32[8,32]{1,0:T(8,128)}', space=vmem, size = 0x1000, scoped, tag = 'scratch operand']
  #allocation4 [shape = 'f32[64,32]{1,0:T(8,128)}', space=vmem, size = 0x8000, scoped, tag = 'scratch operand']
  %s0 = inlined_call_operand.vmem [shape: bf16[64,128], index: 0, kind: input, shape index: {}]
  %s1 = inlined_call_operand.vmem [shape: bf16[32,128], index: 1, kind: input, shape index: {}]
  %s2 = inlined_call_operand.vmem [shape: f32[1,32], index: 2, kind: input, shape index: {}]
  %s3 = inlined_call_operand.vmem [shape: f32[1,32], index: 3, kind: input, shape index: {}]
  %s4 = inlined_call_operand.vmem [shape: bf16[32,8], index: 4, kind: input, shape index: {}]
  %s5 = inlined_call_operand.vmem [shape: f32[1,8], index: 5, kind: input, shape index: {}]
  %s6 = inlined_call_operand.vmem [shape: f32[64,8], index: 6, kind: output, shape index: {}]
  %s7 = sld [smem:[#allocation0]]
  $region38: #{lstm_model_forward.3} parent=0
    _
  %s9 = ssub.s32 1, %s7
  %s10 = scalar_select 0, %s9, %s7
  // Predicated region
  $region2: #{lstm_model_forward.3} parent=0 // pred_check
    _
  $region3: #{lstm_model_forward.3} parent=0 // pred_check_branch
    %12 = sbr.rel (0) target = $region5
  $region4: #{lstm_model_forward.3} parent=0 // pred_region
    _
  $region5: #{lstm_model_forward.3} parent=0 // pred_fallthru
    _
  // Predicated region
  $region6: #{lstm_model_forward.3} parent=0 // pred_check
    _
  $region7: #{lstm_model_forward.3} parent=0 // pred_check_branch
    %14 = sbr.rel (0) target = $region9
  $region8: #{lstm_model_forward.3} parent=0 // pred_region
    _
  $region9: #{lstm_model_forward.3} parent=0 // pred_fallthru
    _
  // Predicated region
  $region10: #{lstm_model_forward.3} parent=0 // pred_check
    _
  $region11: #{lstm_model_forward.3} parent=0 // pred_check_branch
    %16 = sbr.rel (0) target = $region13
  $region12: #{lstm_model_forward.3} parent=0 // pred_region
    _
  $region13: #{lstm_model_forward.3} parent=0 // pred_fallthru
    _
  // Predicated region
  $region14: #{lstm_model_forward.3} parent=0 // pred_check
    _
  $region15: #{lstm_model_forward.3} parent=0 // pred_check_branch
    %18 = sbr.rel (0) target = $region17
  $region16: #{lstm_model_forward.3} parent=0 // pred_region
    _
  $region17: #{lstm_model_forward.3} parent=0 // pred_fallthru
    _
  // Predicated region
  $region18: #{lstm_model_forward.3} parent=0 // pred_check
    _
  $region19: #{lstm_model_forward.3} parent=0 // pred_check_branch
    %20 = sbr.rel (0) target = $region21
  $region20: #{lstm_model_forward.3} parent=0 // pred_region
    _
  $region21: #{lstm_model_forward.3} parent=0 // pred_fallthru
    _
  // Predicated region
  $region22: #{lstm_model_forward.3} parent=0 // pred_check
    _
  $region23: #{lstm_model_forward.3} parent=0 // pred_check_branch
    %22 = sbr.rel (0) target = $region25
  $region24: #{lstm_model_forward.3} parent=0 // pred_region
    _
  $region25: #{lstm_model_forward.3} parent=0 // pred_fallthru
    _
  %p24 = scmp.eq.s32.totalorder 0, 0
  // Predicated region
  $region26: #{lstm_model_forward.3} parent=0 // pred_check
    %p25 = pneg %p24
  $region27: #{lstm_model_forward.3} parent=0 // pred_check_branch
    %27 = sbr.rel (%p25) target = $region29
  $region28: #{lstm_model_forward.3} parent=0 // pred_region
    %vm28 = vcmask 261120
    %29 = vst.msk [vmem:[#allocation2] sm:$0xff] %vm28, 0.0
    %30 = vst.msk [vmem:[#allocation3] sm:$0xff] %vm28, 0.0
  $region29: #{lstm_model_forward.3} parent=0 // pred_fallthru
    _
  %v31 = vld [vmem:[%s1] sm:$0xf]
  %v32 = vld [vmem:[%s1 + $0x4] sm:$0xf]
  %v33 = vld [vmem:[%s1 + $0x8] sm:$0xf]
  %v34 = vld [vmem:[%s1 + $0xc] sm:$0xf]
  %v35 = vld [vmem:[#allocation2] sm:$0xff]
  %v36 = vld [vmem:[#allocation3] sm:$0xff]
  %v37 = vld [vmem:[%s0] sm:$0xf]
  %v38 = vunpack.c.l.bf16 %v37
  %v39 = vpack.c.bf16 %v35, %v35
  %v44 = vunpack.c.l.b16 %v31
  %v45 = vunpack.c.l.b16 %v32
  %v46 = vunpack.c.l.b16 %v33
  %v47 = vunpack.c.l.b16 %v34
  %v48 = vpack.c.b16 %v45, %v44
  %v49 = vpack.c.b16 %v47, %v46
  %vm52 = vcmask 261120
  %v54 = vsel %vm52, %v39, 0
  %56 = vmatprep.subr.bf16.mxu0 0
  %57 = vmatpush1.bf16.msra.mxu0 %v48
  %58 = vmatprep.subr.bf16.mxu0 0
  %59 = vmatpush1.bf16.msra.mxu0 %v49
  %60 = vmatprep.subr.bf16.mxu0 0
  %61 = vmatpush1.bf16.msra.mxu0 0
  %62 = vmatprep.subr.bf16.mxu0 0
  %63 = vmatpush1.bf16.msra.mxu0 0
  %64 = vmatprep.subr.bf16.mxu0 0
  %65 = vmatpush1.bf16.msra.mxu0 0
  %66 = vmatprep.subr.bf16.mxu0 0
  %67 = vmatpush1.bf16.msra.mxu0 0
  %68 = vmatprep.subr.bf16.mxu0 0
  %69 = vmatpush1.bf16.msra.mxu0 0
  %70 = vmatprep.subr.bf16.mxu0 0
  %71 = vmatpush1.bf16.msra.mxu0 0
  %72 = vmatprep.subr.bf16.mxu0 0
  %73 = vmatpush1.bf16.msra.mxu0 0
  %74 = vmatprep.subr.bf16.mxu0 0
  %75 = vmatpush1.bf16.msra.mxu0 0
  %76 = vmatprep.subr.bf16.mxu0 0
  %77 = vmatpush1.bf16.msra.mxu0 0
  %78 = vmatprep.subr.bf16.mxu0 0
  %79 = vmatpush1.bf16.msra.mxu0 0
  %80 = vmatprep.subr.bf16.mxu0 0
  %81 = vmatpush1.bf16.msra.mxu0 0
  %82 = vmatprep.subr.bf16.mxu0 0
  %83 = vmatpush1.bf16.msra.mxu0 0
  %84 = vmatprep.subr.bf16.mxu0 0
  %85 = vmatpush1.bf16.msra.mxu0 0
  %86 = vmatprep.subr.bf16.mxu0 0
  %87 = vmatpush1.bf16.msra.mxu0 0
  %88 = vmatprep.mubr.bf16.mxu0 0
  %89 = vmatmul.mubr.bf16.gmra.mrb[0].mxu0 %v54
  %v90 = vpop.f32.mrb[0].mxu0
  %v91 = vadd.f32 0.0, %v90
  %v92 = vpop.f32.mrb[0].mxu0
  %v93 = vpop.f32.mrb[0].mxu0
  %v94 = vpop.f32.mrb[0].mxu0
  %95 = vdwg.mxu0
  %v96 = vadd.f32 %v38, %v91
  %v97 = vxor.u32 %v96, 2147483648
  %v98 = vmul.f32 %v97, 1.442695
  %v99 = vpow.pop %v98
  %v100 = vadd.f32 %v99, 1.0
  %v101 = vrcp.pop %v100
  %v102 = vmul.f32 1.0, %v101
  %v103 = vtanh.pop %v96
  %105 = vrot.lane.b32.xlu0 %v36, 32
  %v106 = vpop.permute.xlu0 %105
  %v108 = vmul.f32 %v102, %v106
  %110 = vrot.lane.b32.xlu0 %v103, 32
  %v111 = vpop.permute.xlu0 %110
  %v113 = vmul.f32 %v102, %v111
  %115 = vrot.lane.b32.xlu0 %v113, 32
  %v116 = vpop.permute.xlu0 %115
  %v118 = vadd.f32 %v108, %v116
  %v119 = vtanh.pop %v118
  %121 = vrot.lane.b32.xlu0 %v119, 32
  %v122 = vpop.permute.xlu0 %121
  %v124 = vmul.f32 %v102, %v122
  %126 = vrot.lane.b32.xlu0 %v124, 64
  %v127 = vpop.permute.xlu0 %126
  %129 = vst.msk [vmem:[#allocation4] sm:$0xff] %vm52, %v127
  %s130 = scalar_lea.vmem %s0, 4
  %v131 = vld [vmem:[%s130] sm:$0xf]
  %v132 = vunpack.c.l.bf16 %v131
  %v133 = vpack.c.bf16 %v124, %v124
  %135 = vrot.lane.b32.xlu0 %v133, 64
  %v136 = vpop.permute.xlu0 %135
  %v138 = vsel %vm52, %v136, 0
  %140 = vmatprep.subr.bf16.mxu0 0
  %141 = vmatpush1.bf16.msra.mxu0 %v48
  %142 = vmatprep.subr.bf16.mxu0 0
  %143 = vmatpush1.bf16.msra.mxu0 %v49
  %144 = vmatprep.subr.bf16.mxu0 0
  %145 = vmatpush1.bf16.msra.mxu0 0
  %146 = vmatprep.subr.bf16.mxu0 0
  %147 = vmatpush1.bf16.msra.mxu0 0
  %148 = vmatprep.subr.bf16.mxu0 0
  %149 = vmatpush1.bf16.msra.mxu0 0
  %150 = vmatprep.subr.bf16.mxu0 0
  %151 = vmatpush1.bf16.msra.mxu0 0
  %152 = vmatprep.subr.bf16.mxu0 0
  %153 = vmatpush1.bf16.msra.mxu0 0
  %154 = vmatprep.subr.bf16.mxu0 0
  %155 = vmatpush1.bf16.msra.mxu0 0
  %156 = vmatprep.subr.bf16.mxu0 0
  %157 = vmatpush1.bf16.msra.mxu0 0
  %158 = vmatprep.subr.bf16.mxu0 0
  %159 = vmatpush1.bf16.msra.mxu0 0
  %160 = vmatprep.subr.bf16.mxu0 0
  %161 = vmatpush1.bf16.msra.mxu0 0
  %162 = vmatprep.subr.bf16.mxu0 0
  %163 = vmatpush1.bf16.msra.mxu0 0
  %164 = vmatprep.subr.bf16.mxu0 0
  %165 = vmatpush1.bf16.msra.mxu0 0
  %166 = vmatprep.subr.bf16.mxu0 0
  %167 = vmatpush1.bf16.msra.mxu0 0
  %168 = vmatprep.subr.bf16.mxu0 0
  %169 = vmatpush1.bf16.msra.mxu0 0
  %170 = vmatprep.subr.bf16.mxu0 0
  %171 = vmatpush1.bf16.msra.mxu0 0
  %172 = vmatprep.mubr.bf16.mxu0 0
  %173 = vmatmul.mubr.bf16.gmra.mrb[0].mxu0 %v138
  %v174 = vpop.f32.mrb[0].mxu0
  %v175 = vadd.f32 0.0, %v174
  %v176 = vpop.f32.mrb[0].mxu0
  %v177 = vpop.f32.mrb[0].mxu0
  %v178 = vpop.f32.mrb[0].mxu0
  %179 = vdwg.mxu0
  %v180 = vadd.f32 %v132, %v175
  %v181 = vxor.u32 %v180, 2147483648
  %v182 = vmul.f32 %v181, 1.442695
  %v183 = vpow.pop %v182
  %v184 = vadd.f32 %v183, 1.0
  %v185 = vrcp.pop %v184
  %v186 = vmul.f32 1.0, %v185
  %v187 = vtanh.pop %v180
  %v188 = vmul.f32 %v186, %v118
  %190 = vrot.lane.b32.xlu0 %v187, 32
  %v191 = vpop.permute.xlu0 %190
  %v193 = vmul.f32 %v186, %v191
  %195 = vrot.lane.b32.xlu0 %v193, 32
  %v196 = vpop.permute.xlu0 %195
  %v198 = vadd.f32 %v188, %v196
  %v199 = vtanh.pop %v198
  %201 = vrot.lane.b32.xlu0 %v199, 32
  %v202 = vpop.permute.xlu0 %201
  %v204 = vmul.f32 %v186, %v202
  %206 = vrot.lane.b32.xlu0 %v204, 64
  %v207 = vpop.permute.xlu0 %206
  %s209 = scalar_lea.vmem [#allocation4], 8
  %210 = vst.msk [vmem:[%s209] sm:$0xff] %vm52, %v207
  %s211 = scalar_lea.vmem %s0, 8
  %v212 = vld [vmem:[%s211] sm:$0xf]
  %v213 = vunpack.c.l.bf16 %v212
  %v214 = vpack.c.bf16 %v204, %v204
  %216 = vrot.lane.b32.xlu0 %v214, 64
  %v217 = vpop.permute.xlu0 %216
  %v219 = vsel %vm52, %v217, 0
  %221 = vmatprep.subr.bf16.mxu0 0
  %222 = vmatpush1.bf16.msra.mxu0 %v48
  %223 = vmatprep.subr.bf16.mxu0 0
  %224 = vmatpush1.bf16.msra.mxu0 %v49
  %225 = vmatprep.subr.bf16.mxu0 0
  %226 = vmatpush1.bf16.msra.mxu0 0
  %227 = vmatprep.subr.bf16.mxu0 0
  %228 = vmatpush1.bf16.msra.mxu0 0
  %229 = vmatprep.subr.bf16.mxu0 0
  %230 = vmatpush1.bf16.msra.mxu0 0
  %231 = vmatprep.subr.bf16.mxu0 0
  %232 = vmatpush1.bf16.msra.mxu0 0
  %233 = vmatprep.subr.bf16.mxu0 0
  %234 = vmatpush1.bf16.msra.mxu0 0
  %235 = vmatprep.subr.bf16.mxu0 0
  %236 = vmatpush1.bf16.msra.mxu0 0
  %237 = vmatprep.subr.bf16.mxu0 0
  %238 = vmatpush1.bf16.msra.mxu0 0
  %239 = vmatprep.subr.bf16.mxu0 0
  %240 = vmatpush1.bf16.msra.mxu0 0
  %241 = vmatprep.subr.bf16.mxu0 0
  %242 = vmatpush1.bf16.msra.mxu0 0
  %243 = vmatprep.subr.bf16.mxu0 0
  %244 = vmatpush1.bf16.msra.mxu0 0
  %245 = vmatprep.subr.bf16.mxu0 0
  %246 = vmatpush1.bf16.msra.mxu0 0
  %247 = vmatprep.subr.bf16.mxu0 0
  %248 = vmatpush1.bf16.msra.mxu0 0
  %249 = vmatprep.subr.bf16.mxu0 0
  %250 = vmatpush1.bf16.msra.mxu0 0
  %251 = vmatprep.subr.bf16.mxu0 0
  %252 = vmatpush1.bf16.msra.mxu0 0
  %253 = vmatprep.mubr.bf16.mxu0 0
  %254 = vmatmul.mubr.bf16.gmra.mrb[0].mxu0 %v219
  %v255 = vpop.f32.mrb[0].mxu0
  %v256 = vadd.f32 0.0, %v255
  %v257 = vpop.f32.mrb[0].mxu0
  %v258 = vpop.f32.mrb[0].mxu0
  %v259 = vpop.f32.mrb[0].mxu0
  %260 = vdwg.mxu0
  %v261 = vadd.f32 %v213, %v256
  %v262 = vxor.u32 %v261, 2147483648
  %v263 = vmul.f32 %v262, 1.442695
  %v264 = vpow.pop %v263
  %v265 = vadd.f32 %v264, 1.0
  %v266 = vrcp.pop %v265
  %v267 = vmul.f32 1.0, %v266
  %v268 = vtanh.pop %v261
  %v269 = vmul.f32 %v267, %v198
  %271 = vrot.lane.b32.xlu0 %v268, 32
  %v272 = vpop.permute.xlu0 %271
  %v274 = vmul.f32 %v267, %v272
  %276 = vrot.lane.b32.xlu0 %v274, 32
  %v277 = vpop.permute.xlu0 %276
  %v279 = vadd.f32 %v269, %v277
  %v280 = vtanh.pop %v279
  %282 = vrot.lane.b32.xlu0 %v280, 32
  %v283 = vpop.permute.xlu0 %282
  %v285 = vmul.f32 %v267, %v283
  %287 = vrot.lane.b32.xlu0 %v285, 64
  %v288 = vpop.permute.xlu0 %287
  %s290 = scalar_lea.vmem [#allocation4], 16
  %291 = vst.msk [vmem:[%s290] sm:$0xff] %vm52, %v288
  %s292 = scalar_lea.vmem %s0, 12
  %v293 = vld [vmem:[%s292] sm:$0xf]
  %v294 = vunpack.c.l.bf16 %v293
  %v295 = vpack.c.bf16 %v285, %v285
  %297 = vrot.lane.b32.xlu0 %v295, 64
  %v298 = vpop.permute.xlu0 %297
  %v300 = vsel %vm52, %v298, 0
  %302 = vmatprep.subr.bf16.mxu0 0
  %303 = vmatpush1.bf16.msra.mxu0 %v48
  %304 = vmatprep.subr.bf16.mxu0 0
  %305 = vmatpush1.bf16.msra.mxu0 %v49
  %306 = vmatprep.subr.bf16.mxu0 0
  %307 = vmatpush1.bf16.msra.mxu0 0
  %308 = vmatprep.subr.bf16.mxu0 0
  %309 = vmatpush1.bf16.msra.mxu0 0
  %310 = vmatprep.subr.bf16.mxu0 0
  %311 = vmatpush1.bf16.msra.mxu0 0
  %312 = vmatprep.subr.bf16.mxu0 0
  %313 = vmatpush1.bf16.msra.mxu0 0
  %314 = vmatprep.subr.bf16.mxu0 0
  %315 = vmatpush1.bf16.msra.mxu0 0
  %316 = vmatprep.subr.bf16.mxu0 0
  %317 = vmatpush1.bf16.msra.mxu0 0
  %318 = vmatprep.subr.bf16.mxu0 0
  %319 = vmatpush1.bf16.msra.mxu0 0
  %320 = vmatprep.subr.bf16.mxu0 0
  %321 = vmatpush1.bf16.msra.mxu0 0
  %322 = vmatprep.subr.bf16.mxu0 0
  %323 = vmatpush1.bf16.msra.mxu0 0
  %324 = vmatprep.subr.bf16.mxu0 0
  %325 = vmatpush1.bf16.msra.mxu0 0
  %326 = vmatprep.subr.bf16.mxu0 0
  %327 = vmatpush1.bf16.msra.mxu0 0
  %328 = vmatprep.subr.bf16.mxu0 0
  %329 = vmatpush1.bf16.msra.mxu0 0
  %330 = vmatprep.subr.bf16.mxu0 0
  %331 = vmatpush1.bf16.msra.mxu0 0
  %332 = vmatprep.subr.bf16.mxu0 0
  %333 = vmatpush1.bf16.msra.mxu0 0
  %334 = vmatprep.mubr.bf16.mxu0 0
  %335 = vmatmul.mubr.bf16.gmra.mrb[0].mxu0 %v300
  %v336 = vpop.f32.mrb[0].mxu0
  %v337 = vadd.f32 0.0, %v336
  %v338 = vpop.f32.mrb[0].mxu0
  %v339 = vpop.f32.mrb[0].mxu0
  %v340 = vpop.f32.mrb[0].mxu0
  %341 = vdwg.mxu0
  %v342 = vadd.f32 %v294, %v337
  %v343 = vxor.u32 %v342, 2147483648
  %v344 = vmul.f32 %v343, 1.442695
  %v345 = vpow.pop %v344
  %v346 = vadd.f32 %v345, 1.0
  %v347 = vrcp.pop %v346
  %v348 = vmul.f32 1.0, %v347
  %v349 = vtanh.pop %v342
  %v350 = vmul.f32 %v348, %v279
  %352 = vrot.lane.b32.xlu0 %v349, 32
  %v353 = vpop.permute.xlu0 %352
  %v355 = vmul.f32 %v348, %v353
  %357 = vrot.lane.b32.xlu0 %v355, 32
  %v358 = vpop.permute.xlu0 %357
  %v360 = vadd.f32 %v350, %v358
  %v361 = vtanh.pop %v360
  %363 = vrot.lane.b32.xlu0 %v361, 32
  %v364 = vpop.permute.xlu0 %363
  %v366 = vmul.f32 %v348, %v364
  %368 = vrot.lane.b32.xlu0 %v366, 64
  %v369 = vpop.permute.xlu0 %368
  %s371 = scalar_lea.vmem [#allocation4], 24
  %372 = vst.msk [vmem:[%s371] sm:$0xff] %vm52, %v369
  %s373 = scalar_lea.vmem %s0, 16
  %v374 = vld [vmem:[%s373] sm:$0xf]
  %v375 = vunpack.c.l.bf16 %v374
  %v376 = vpack.c.bf16 %v366, %v366
  %378 = vrot.lane.b32.xlu0 %v376, 64
  %v379 = vpop.permute.xlu0 %378
  %v381 = vsel %vm52, %v379, 0
  %383 = vmatprep.subr.bf16.mxu0 0
  %384 = vmatpush1.bf16.msra.mxu0 %v48
  %385 = vmatprep.subr.bf16.mxu0 0
  %386 = vmatpush1.bf16.msra.mxu0 %v49
  %387 = vmatprep.subr.bf16.mxu0 0
  %388 = vmatpush1.bf16.msra.mxu0 0
  %389 = vmatprep.subr.bf16.mxu0 0
  %390 = vmatpush1.bf16.msra.mxu0 0
  %391 = vmatprep.subr.bf16.mxu0 0
  %392 = vmatpush1.bf16.msra.mxu0 0
  %393 = vmatprep.subr.bf16.mxu0 0
  %394 = vmatpush1.bf16.msra.mxu0 0
  %395 = vmatprep.subr.bf16.mxu0 0
  %396 = vmatpush1.bf16.msra.mxu0 0
  %397 = vmatprep.subr.bf16.mxu0 0
  %398 = vmatpush1.bf16.msra.mxu0 0
  %399 = vmatprep.subr.bf16.mxu0 0
  %400 = vmatpush1.bf16.msra.mxu0 0
  %401 = vmatprep.subr.bf16.mxu0 0
  %402 = vmatpush1.bf16.msra.mxu0 0
  %403 = vmatprep.subr.bf16.mxu0 0
  %404 = vmatpush1.bf16.msra.mxu0 0
  %405 = vmatprep.subr.bf16.mxu0 0
  %406 = vmatpush1.bf16.msra.mxu0 0
  %407 = vmatprep.subr.bf16.mxu0 0
  %408 = vmatpush1.bf16.msra.mxu0 0
  %409 = vmatprep.subr.bf16.mxu0 0
  %410 = vmatpush1.bf16.msra.mxu0 0
  %411 = vmatprep.subr.bf16.mxu0 0
  %412 = vmatpush1.bf16.msra.mxu0 0
  %413 = vmatprep.subr.bf16.mxu0 0
  %414 = vmatpush1.bf16.msra.mxu0 0
  %415 = vmatprep.mubr.bf16.mxu0 0
  %416 = vmatmul.mubr.bf16.gmra.mrb[0].mxu0 %v381
  %v417 = vpop.f32.mrb[0].mxu0
  %v418 = vadd.f32 0.0, %v417
  %v419 = vpop.f32.mrb[0].mxu0
  %v420 = vpop.f32.mrb[0].mxu0
  %v421 = vpop.f32.mrb[0].mxu0
  %422 = vdwg.mxu0
  %v423 = vadd.f32 %v375, %v418
  %v424 = vxor.u32 %v423, 2147483648
  %v425 = vmul.f32 %v424, 1.442695
  %v426 = vpow.pop %v425
  %v427 = vadd.f32 %v426, 1.0
  %v428 = vrcp.pop %v427
  %v429 = vmul.f32 1.0, %v428
  %v430 = vtanh.pop %v423
  %v431 = vmul.f32 %v429, %v360
  %433 = vrot.lane.b32.xlu0 %v430, 32
  %v434 = vpop.permute.xlu0 %433
  %v436 = vmul.f32 %v429, %v434
  %438 = vrot.lane.b32.xlu0 %v436, 32
  %v439 = vpop.permute.xlu0 %438
  %v441 = vadd.f32 %v431, %v439
  %v442 = vtanh.pop %v441
  %444 = vrot.lane.b32.xlu0 %v442, 32
  %v445 = vpop.permute.xlu0 %444
  %v447 = vmul.f32 %v429, %v445
  %449 = vrot.lane.b32.xlu0 %v447, 64
  %v450 = vpop.permute.xlu0 %449
  %s452 = scalar_lea.vmem [#allocation4], 32
  %453 = vst.msk [vmem:[%s452] sm:$0xff] %vm52, %v450
  %s454 = scalar_lea.vmem %s0, 20
  %v455 = vld [vmem:[%s454] sm:$0xf]
  %v456 = vunpack.c.l.bf16 %v455
  %v457 = vpack.c.bf16 %v447, %v447
  %459 = vrot.lane.b32.xlu0 %v457, 64
  %v460 = vpop.permute.xlu0 %459
  %v462 = vsel %vm52, %v460, 0
  %464 = vmatprep.subr.bf16.mxu0 0
  %465 = vmatpush1.bf16.msra.mxu0 %v48
  %466 = vmatprep.subr.bf16.mxu0 0
  %467 = vmatpush1.bf16.msra.mxu0 %v49
  %468 = vmatprep.subr.bf16.mxu0 0
  %469 = vmatpush1.bf16.msra.mxu0 0
  %470 = vmatprep.subr.bf16.mxu0 0
  %471 = vmatpush1.bf16.msra.mxu0 0
  %472 = vmatprep.subr.bf16.mxu0 0
  %473 = vmatpush1.bf16.msra.mxu0 0
  %474 = vmatprep.subr.bf16.mxu0 0
  %475 = vmatpush1.bf16.msra.mxu0 0
  %476 = vmatprep.subr.bf16.mxu0 0
  %477 = vmatpush1.bf16.msra.mxu0 0
  %478 = vmatprep.subr.bf16.mxu0 0
  %479 = vmatpush1.bf16.msra.mxu0 0
  %480 = vmatprep.subr.bf16.mxu0 0
  %481 = vmatpush1.bf16.msra.mxu0 0
  %482 = vmatprep.subr.bf16.mxu0 0
  %483 = vmatpush1.bf16.msra.mxu0 0
  %484 = vmatprep.subr.bf16.mxu0 0
  %485 = vmatpush1.bf16.msra.mxu0 0
  %486 = vmatprep.subr.bf16.mxu0 0
  %487 = vmatpush1.bf16.msra.mxu0 0
  %488 = vmatprep.subr.bf16.mxu0 0
  %489 = vmatpush1.bf16.msra.mxu0 0
  %490 = vmatprep.subr.bf16.mxu0 0
  %491 = vmatpush1.bf16.msra.mxu0 0
  %492 = vmatprep.subr.bf16.mxu0 0
  %493 = vmatpush1.bf16.msra.mxu0 0
  %494 = vmatprep.subr.bf16.mxu0 0
  %495 = vmatpush1.bf16.msra.mxu0 0
  %496 = vmatprep.mubr.bf16.mxu0 0
  %497 = vmatmul.mubr.bf16.gmra.mrb[0].mxu0 %v462
  %v498 = vpop.f32.mrb[0].mxu0
  %v499 = vadd.f32 0.0, %v498
  %v500 = vpop.f32.mrb[0].mxu0
  %v501 = vpop.f32.mrb[0].mxu0
  %v502 = vpop.f32.mrb[0].mxu0
  %503 = vdwg.mxu0
  %v504 = vadd.f32 %v456, %v499
  %v505 = vxor.u32 %v504, 2147483648
  %v506 = vmul.f32 %v505, 1.442695
  %v507 = vpow.pop %v506
  %v508 = vadd.f32 %v507, 1.0
  %v509 = vrcp.pop %v508
  %v510 = vmul.f32 1.0, %v509
  %v511 = vtanh.pop %v504
  %v512 = vmul.f32 %v510, %v441
  %514 = vrot.lane.b32.xlu0 %v511, 32
  %v515 = vpop.permute.xlu0 %514
  %v517 = vmul.f32 %v510, %v515
  %519 = vrot.lane.b32.xlu0 %v517, 32
  %v520 = vpop.permute.xlu0 %519
  %v522 = vadd.f32 %v512, %v520
  %v523 = vtanh.pop %v522
  %525 = vrot.lane.b32.xlu0 %v523, 32
  %v526 = vpop.permute.xlu0 %525
  %v528 = vmul.f32 %v510, %v526
  %530 = vrot.lane.b32.xlu0 %v528, 64
  %v531 = vpop.permute.xlu0 %530
  %s533 = scalar_lea.vmem [#allocation4], 40
  %534 = vst.msk [vmem:[%s533] sm:$0xff] %vm52, %v531
  %s535 = scalar_lea.vmem %s0, 24
  %v536 = vld [vmem:[%s535] sm:$0xf]
  %v537 = vunpack.c.l.bf16 %v536
  %v538 = vpack.c.bf16 %v528, %v528
  %540 = vrot.lane.b32.xlu0 %v538, 64
  %v541 = vpop.permute.xlu0 %540
  %v543 = vsel %vm52, %v541, 0
  %545 = vmatprep.subr.bf16.mxu0 0
  %546 = vmatpush1.bf16.msra.mxu0 %v48
  %547 = vmatprep.subr.bf16.mxu0 0
  %548 = vmatpush1.bf16.msra.mxu0 %v49
  %549 = vmatprep.subr.bf16.mxu0 0
  %550 = vmatpush1.bf16.msra.mxu0 0
  %551 = vmatprep.subr.bf16.mxu0 0
  %552 = vmatpush1.bf16.msra.mxu0 0
  %553 = vmatprep.subr.bf16.mxu0 0
  %554 = vmatpush1.bf16.msra.mxu0 0
  %555 = vmatprep.subr.bf16.mxu0 0
  %556 = vmatpush1.bf16.msra.mxu0 0
  %557 = vmatprep.subr.bf16.mxu0 0
  %558 = vmatpush1.bf16.msra.mxu0 0
  %559 = vmatprep.subr.bf16.mxu0 0
  %560 = vmatpush1.bf16.msra.mxu0 0
  %561 = vmatprep.subr.bf16.mxu0 0
  %562 = vmatpush1.bf16.msra.mxu0 0
  %563 = vmatprep.subr.bf16.mxu0 0
  %564 = vmatpush1.bf16.msra.mxu0 0
  %565 = vmatprep.subr.bf16.mxu0 0
  %566 = vmatpush1.bf16.msra.mxu0 0
  %567 = vmatprep.subr.bf16.mxu0 0
  %568 = vmatpush1.bf16.msra.mxu0 0
  %569 = vmatprep.subr.bf16.mxu0 0
  %570 = vmatpush1.bf16.msra.mxu0 0
  %571 = vmatprep.subr.bf16.mxu0 0
  %572 = vmatpush1.bf16.msra.mxu0 0
  %573 = vmatprep.subr.bf16.mxu0 0
  %574 = vmatpush1.bf16.msra.mxu0 0
  %575 = vmatprep.subr.bf16.mxu0 0
  %576 = vmatpush1.bf16.msra.mxu0 0
  %577 = vmatprep.mubr.bf16.mxu0 0
  %578 = vmatmul.mubr.bf16.gmra.mrb[0].mxu0 %v543
  %v579 = vpop.f32.mrb[0].mxu0
  %v580 = vadd.f32 0.0, %v579
  %v581 = vpop.f32.mrb[0].mxu0
  %v582 = vpop.f32.mrb[0].mxu0
  %v583 = vpop.f32.mrb[0].mxu0
  %584 = vdwg.mxu0
  %v585 = vadd.f32 %v537, %v580
  %v586 = vxor.u32 %v585, 2147483648
  %v587 = vmul.f32 %v586, 1.442695
  %v588 = vpow.pop %v587
  %v589 = vadd.f32 %v588, 1.0
  %v590 = vrcp.pop %v589
  %v591 = vmul.f32 1.0, %v590
  %v592 = vtanh.pop %v585
  %v593 = vmul.f32 %v591, %v522
  %595 = vrot.lane.b32.xlu0 %v592, 32
  %v596 = vpop.permute.xlu0 %595
  %v598 = vmul.f32 %v591, %v596
  %600 = vrot.lane.b32.xlu0 %v598, 32
  %v601 = vpop.permute.xlu0 %600
  %v603 = vadd.f32 %v593, %v601
  %v604 = vtanh.pop %v603
  %606 = vrot.lane.b32.xlu0 %v604, 32
  %v607 = vpop.permute.xlu0 %606
  %v609 = vmul.f32 %v591, %v607
  %611 = vrot.lane.b32.xlu0 %v609, 64
  %v612 = vpop.permute.xlu0 %611
  %s614 = scalar_lea.vmem [#allocation4], 48
  %615 = vst.msk [vmem:[%s614] sm:$0xff] %vm52, %v612
  %s616 = scalar_lea.vmem %s0, 28
  %v617 = vld [vmem:[%s616] sm:$0xf]
  %v618 = vunpack.c.l.bf16 %v617
  %v619 = vpack.c.bf16 %v609, %v609
  %621 = vrot.lane.b32.xlu0 %v619, 64
  %v622 = vpop.permute.xlu0 %621
  %v624 = vsel %vm52, %v622, 0
  %626 = vmatprep.subr.bf16.mxu0 0
  %627 = vmatpush1.bf16.msra.mxu0 %v48
  %628 = vmatprep.subr.bf16.mxu0 0
  %629 = vmatpush1.bf16.msra.mxu0 %v49
  %630 = vmatprep.subr.bf16.mxu0 0
  %631 = vmatpush1.bf16.msra.mxu0 0
  %632 = vmatprep.subr.bf16.mxu0 0
  %633 = vmatpush1.bf16.msra.mxu0 0
  %634 = vmatprep.subr.bf16.mxu0 0
  %635 = vmatpush1.bf16.msra.mxu0 0
  %636 = vmatprep.subr.bf16.mxu0 0
  %637 = vmatpush1.bf16.msra.mxu0 0
  %638 = vmatprep.subr.bf16.mxu0 0
  %639 = vmatpush1.bf16.msra.mxu0 0
  %640 = vmatprep.subr.bf16.mxu0 0
  %641 = vmatpush1.bf16.msra.mxu0 0
  %642 = vmatprep.subr.bf16.mxu0 0
  %643 = vmatpush1.bf16.msra.mxu0 0
  %644 = vmatprep.subr.bf16.mxu0 0
  %645 = vmatpush1.bf16.msra.mxu0 0
  %646 = vmatprep.subr.bf16.mxu0 0
  %647 = vmatpush1.bf16.msra.mxu0 0
  %648 = vmatprep.subr.bf16.mxu0 0
  %649 = vmatpush1.bf16.msra.mxu0 0
  %650 = vmatprep.subr.bf16.mxu0 0
  %651 = vmatpush1.bf16.msra.mxu0 0
  %652 = vmatprep.subr.bf16.mxu0 0
  %653 = vmatpush1.bf16.msra.mxu0 0
  %654 = vmatprep.subr.bf16.mxu0 0
  %655 = vmatpush1.bf16.msra.mxu0 0
  %656 = vmatprep.subr.bf16.mxu0 0
  %657 = vmatpush1.bf16.msra.mxu0 0
  %658 = vmatprep.mubr.bf16.mxu0 0
  %659 = vmatmul.mubr.bf16.gmra.mrb[0].mxu0 %v624
  %v660 = vpop.f32.mrb[0].mxu0
  %v661 = vadd.f32 0.0, %v660
  %v662 = vpop.f32.mrb[0].mxu0
  %v663 = vpop.f32.mrb[0].mxu0
  %v664 = vpop.f32.mrb[0].mxu0
  %665 = vdwg.mxu0
  %v666 = vadd.f32 %v618, %v661
  %v667 = vxor.u32 %v666, 2147483648
  %v668 = vmul.f32 %v667, 1.442695
  %v669 = vpow.pop %v668
  %v670 = vadd.f32 %v669, 1.0
  %v671 = vrcp.pop %v670
  %v672 = vmul.f32 1.0, %v671
  %v673 = vtanh.pop %v666
  %v674 = vmul.f32 %v672, %v603
  %676 = vrot.lane.b32.xlu0 %v673, 32
  %v677 = vpop.permute.xlu0 %676
  %v679 = vmul.f32 %v672, %v677
  %681 = vrot.lane.b32.xlu0 %v679, 32
  %v682 = vpop.permute.xlu0 %681
  %v684 = vadd.f32 %v674, %v682
  %v685 = vtanh.pop %v684
  %687 = vrot.lane.b32.xlu0 %v685, 32
  %v688 = vpop.permute.xlu0 %687
  %v690 = vmul.f32 %v672, %v688
  %692 = vrot.lane.b32.xlu0 %v690, 64
  %v693 = vpop.permute.xlu0 %692
  %s695 = scalar_lea.vmem [#allocation4], 56
  %696 = vst.msk [vmem:[%s695] sm:$0xff] %vm52, %v693
  %697 = vst.msk [vmem:[#allocation2] sm:$0xff] %vm52, %v693
  %699 = vrot.lane.b32.xlu0 %v684, 96
  %v700 = vpop.permute.xlu0 %699
  %702 = vst.msk [vmem:[#allocation3] sm:$0xff] %vm52, %v700
  %v703 = vld [vmem:[#allocation4] sm:$0xff]
  %v704 = vld [vmem:[#allocation4 + $0x8] sm:$0xff]
  %v705 = vld [vmem:[#allocation4 + $0x10] sm:$0xff]
  %v706 = vld [vmem:[#allocation4 + $0x18] sm:$0xff]
  %v707 = vld [vmem:[#allocation4 + $0x20] sm:$0xff]
  %v708 = vld [vmem:[#allocation4 + $0x28] sm:$0xff]
  %v709 = vld [vmem:[#allocation4 + $0x30] sm:$0xff]
  %v710 = vld [vmem:[#allocation4 + $0x38] sm:$0xff]
  %v711 = vsel %vm52, %v703, 0.0
  %712 = vadd.xlane.f32.xlu0 %v711
  %v713 = vpop.xlane.xlu0 %712
  %v714 = vsel %vm52, %v704, 0.0
  %715 = vadd.xlane.f32.xlu0 %v714
  %v716 = vpop.xlane.xlu0 %715
  %v717 = vsel %vm52, %v705, 0.0
  %718 = vadd.xlane.f32.xlu0 %v717
  %v719 = vpop.xlane.xlu0 %718
  %v720 = vsel %vm52, %v706, 0.0
  %721 = vadd.xlane.f32.xlu0 %v720
  %v722 = vpop.xlane.xlu0 %721
  %v723 = vsel %vm52, %v707, 0.0
  %724 = vadd.xlane.f32.xlu0 %v723
  %v725 = vpop.xlane.xlu0 %724
  %v726 = vsel %vm52, %v708, 0.0
  %727 = vadd.xlane.f32.xlu0 %v726
  %v728 = vpop.xlane.xlu0 %727
  %v729 = vsel %vm52, %v709, 0.0
  %730 = vadd.xlane.f32.xlu0 %v729
  %v731 = vpop.xlane.xlu0 %730
  %v732 = vsel %vm52, %v710, 0.0
  %733 = vadd.xlane.f32.xlu0 %v732
  %v734 = vpop.xlane.xlu0 %733
  %v735 = vrcp.pop 32.0
  %v736 = vmul.f32 %v713, %v735
  %v737 = vmul.f32 %v716, %v735
  %v738 = vmul.f32 %v719, %v735
  %v739 = vmul.f32 %v722, %v735
  %v740 = vmul.f32 %v725, %v735
  %v741 = vmul.f32 %v728, %v735
  %v742 = vmul.f32 %v731, %v735
  %v743 = vmul.f32 %v734, %v735
  %v744 = vsub.f32 %v703, %v736
  %v745 = vsub.f32 %v704, %v737
  %v746 = vsub.f32 %v705, %v738
  %v747 = vsub.f32 %v706, %v739
  %v748 = vsub.f32 %v707, %v740
  %v749 = vsub.f32 %v708, %v741
  %v750 = vsub.f32 %v709, %v742
  %v751 = vsub.f32 %v710, %v743
  %v752 = vmul.f32 %v744, %v744
  %v753 = vmul.f32 %v745, %v745
  %v754 = vmul.f32 %v746, %v746
  %v755 = vmul.f32 %v747, %v747
  %v756 = vmul.f32 %v748, %v748
  %v757 = vmul.f32 %v749, %v749
  %v758 = vmul.f32 %v750, %v750
  %v759 = vmul.f32 %v751, %v751
  %v760 = vsel %vm52, %v752, 0.0
  %761 = vadd.xlane.f32.xlu0 %v760
  %v762 = vpop.xlane.xlu0 %761
  %v763 = vsel %vm52, %v753, 0.0
  %764 = vadd.xlane.f32.xlu0 %v763
  %v765 = vpop.xlane.xlu0 %764
  %v766 = vsel %vm52, %v754, 0.0
  %767 = vadd.xlane.f32.xlu0 %v766
  %v768 = vpop.xlane.xlu0 %767
  %v769 = vsel %vm52, %v755, 0.0
  %770 = vadd.xlane.f32.xlu0 %v769
  %v771 = vpop.xlane.xlu0 %770
  %v772 = vsel %vm52, %v756, 0.0
  %773 = vadd.xlane.f32.xlu0 %v772
  %v774 = vpop.xlane.xlu0 %773
  %v775 = vsel %vm52, %v757, 0.0
  %776 = vadd.xlane.f32.xlu0 %v775
  %v777 = vpop.xlane.xlu0 %776
  %v778 = vsel %vm52, %v758, 0.0
  %779 = vadd.xlane.f32.xlu0 %v778
  %v780 = vpop.xlane.xlu0 %779
  %v781 = vsel %vm52, %v759, 0.0
  %782 = vadd.xlane.f32.xlu0 %v781
  %v783 = vpop.xlane.xlu0 %782
  %v784 = vmul.f32 %v762, %v735
  %v785 = vmul.f32 %v765, %v735
  %v786 = vmul.f32 %v768, %v735
  %v787 = vmul.f32 %v771, %v735
  %v788 = vmul.f32 %v774, %v735
  %v789 = vmul.f32 %v777, %v735
  %v790 = vmul.f32 %v780, %v735
  %v791 = vmul.f32 %v783, %v735
  %v792 = vadd.f32 %v784, 1e-05
  %v793 = vadd.f32 %v785, 1e-05
  %v794 = vadd.f32 %v786, 1e-05
  %v795 = vadd.f32 %v787, 1e-05
  %v796 = vadd.f32 %v788, 1e-05
  %v797 = vadd.f32 %v789, 1e-05
  %v798 = vadd.f32 %v790, 1e-05
  %v799 = vadd.f32 %v791, 1e-05
  %v800 = vrsqrt.pop %v792
  %v801 = vrsqrt.pop %v793
  %v802 = vrsqrt.pop %v794
  %v803 = vrsqrt.pop %v795
  %v804 = vrsqrt.pop %v796
  %v805 = vrsqrt.pop %v797
  %v806 = vrsqrt.pop %v798
  %v807 = vrsqrt.pop %v799
  %v808 = vmul.f32 %v744, %v800
  %v809 = vmul.f32 %v745, %v801
  %v810 = vmul.f32 %v746, %v802
  %v811 = vmul.f32 %v747, %v803
  %v812 = vmul.f32 %v748, %v804
  %v813 = vmul.f32 %v749, %v805
  %v814 = vmul.f32 %v750, %v806
  %v815 = vmul.f32 %v751, %v807
  %v816 = vld [vmem:[%s2] sm:$0x1]
  %v818 = vlaneseq
  %v819 = vshrl.u32 %v818, 7
  %v820 = vsub.s32 0, %v819
  %v821 = vrot.slane %v816, %v820
  %v823 = vmul.f32 %v808, %v821
  %v824 = vmul.f32 %v809, %v821
  %v825 = vmul.f32 %v810, %v821
  %v826 = vmul.f32 %v811, %v821
  %v827 = vmul.f32 %v812, %v821
  %v828 = vmul.f32 %v813, %v821
  %v829 = vmul.f32 %v814, %v821
  %v830 = vmul.f32 %v815, %v821
  %v831 = vld [vmem:[%s3] sm:$0x1]
  %v833 = vlaneseq
  %v834 = vshrl.u32 %v833, 7
  %v835 = vsub.s32 0, %v834
  %v836 = vrot.slane %v831, %v835
  %v838 = vadd.f32 %v823, %v836
  %v839 = vadd.f32 %v824, %v836
  %v840 = vadd.f32 %v825, %v836
  %v841 = vadd.f32 %v826, %v836
  %v842 = vadd.f32 %v827, %v836
  %v843 = vadd.f32 %v828, %v836
  %v844 = vadd.f32 %v829, %v836
  %v845 = vadd.f32 %v830, %v836
  %v846 = vpack.c.bf16 %v839, %v838
  %v847 = vpack.c.bf16 %v841, %v840
  %v848 = vpack.c.bf16 %v843, %v842
  %v849 = vpack.c.bf16 %v845, %v844
  %v850 = vld [vmem:[%s4] sm:$0xf]
  %v851 = vld [vmem:[%s4 + $0x4] sm:$0xf]
  %v852 = vld [vmem:[%s4 + $0x8] sm:$0xf]
  %v853 = vld [vmem:[%s4 + $0xc] sm:$0xf]
  %v854 = vld [vmem:[%s5] sm:$0x1]
  %v856 = vlaneseq
  %v857 = vshrl.u32 %v856, 7
  %v858 = vsub.s32 0, %v857
  %v859 = vrot.slane %v854, %v858
  %v865 = vunpack.c.l.b16 %v850
  %v866 = vunpack.c.l.b16 %v851
  %v867 = vunpack.c.l.b16 %v852
  %v868 = vunpack.c.l.b16 %v853
  %v869 = vpack.c.b16 %v866, %v865
  %v870 = vpack.c.b16 %v868, %v867
  %v874 = vsel %vm52, %v846, 0
  %v877 = vsel %vm52, %v847, 0
  %v880 = vsel %vm52, %v848, 0
  %v883 = vsel %vm52, %v849, 0
  %885 = vmatprep.subr.bf16.mxu0 0
  %886 = vmatpush1.bf16.msra.mxu0 %v869
  %887 = vmatprep.subr.bf16.mxu0 0
  %888 = vmatpush1.bf16.msra.mxu0 %v870
  %889 = vmatprep.subr.bf16.mxu0 0
  %890 = vmatpush1.bf16.msra.mxu0 0
  %891 = vmatprep.subr.bf16.mxu0 0
  %892 = vmatpush1.bf16.msra.mxu0 0
  %893 = vmatprep.subr.bf16.mxu0 0
  %894 = vmatpush1.bf16.msra.mxu0 0
  %895 = vmatprep.subr.bf16.mxu0 0
  %896 = vmatpush1.bf16.msra.mxu0 0
  %897 = vmatprep.subr.bf16.mxu0 0
  %898 = vmatpush1.bf16.msra.mxu0 0
  %899 = vmatprep.subr.bf16.mxu0 0
  %900 = vmatpush1.bf16.msra.mxu0 0
  %901 = vmatprep.subr.bf16.mxu0 0
  %902 = vmatpush1.bf16.msra.mxu0 0
  %903 = vmatprep.subr.bf16.mxu0 0
  %904 = vmatpush1.bf16.msra.mxu0 0
  %905 = vmatprep.subr.bf16.mxu0 0
  %906 = vmatpush1.bf16.msra.mxu0 0
  %907 = vmatprep.subr.bf16.mxu0 0
  %908 = vmatpush1.bf16.msra.mxu0 0
  %909 = vmatprep.subr.bf16.mxu0 0
  %910 = vmatpush1.bf16.msra.mxu0 0
  %911 = vmatprep.subr.bf16.mxu0 0
  %912 = vmatpush1.bf16.msra.mxu0 0
  %913 = vmatprep.subr.bf16.mxu0 0
  %914 = vmatpush1.bf16.msra.mxu0 0
  %915 = vmatprep.subr.bf16.mxu0 0
  %916 = vmatpush1.bf16.msra.mxu0 0
  %917 = vmatprep.mubr.bf16.mxu0 0
  %918 = vmatmul.mubr.bf16.gmra.mrb[0].mxu0 %v874
  %v919 = vpop.f32.mrb[0].mxu0
  %v920 = vadd.f32 %v859, %v919
  %v921 = vpop.f32.mrb[0].mxu0
  %v922 = vpop.f32.mrb[0].mxu0
  %v923 = vadd.f32 %v859, %v922
  %v924 = vpop.f32.mrb[0].mxu0
  %925 = vmatprep.mubr.bf16.mxu0 0
  %926 = vmatmul.mubr.bf16.gmra.mrb[0].mxu0 %v877
  %v927 = vpop.f32.mrb[0].mxu0
  %v928 = vadd.f32 %v859, %v927
  %v929 = vpop.f32.mrb[0].mxu0
  %v930 = vpop.f32.mrb[0].mxu0
  %v931 = vadd.f32 %v859, %v930
  %v932 = vpop.f32.mrb[0].mxu0
  %933 = vmatprep.mubr.bf16.mxu0 0
  %934 = vmatmul.mubr.bf16.gmra.mrb[0].mxu0 %v880
  %v935 = vpop.f32.mrb[0].mxu0
  %v936 = vadd.f32 %v859, %v935
  %v937 = vpop.f32.mrb[0].mxu0
  %v938 = vpop.f32.mrb[0].mxu0
  %v939 = vadd.f32 %v859, %v938
  %v940 = vpop.f32.mrb[0].mxu0
  %941 = vmatprep.mubr.bf16.mxu0 0
  %942 = vmatmul.mubr.bf16.gmra.mrb[0].mxu0 %v883
  %v943 = vpop.f32.mrb[0].mxu0
  %v944 = vadd.f32 %v859, %v943
  %v945 = vpop.f32.mrb[0].mxu0
  %v946 = vpop.f32.mrb[0].mxu0
  %v947 = vadd.f32 %v859, %v946
  %v948 = vpop.f32.mrb[0].mxu0
  %949 = vdwg.mxu0
  %v950 = vxor.u32 %v920, 2147483648
  %v951 = vxor.u32 %v923, 2147483648
  %v952 = vxor.u32 %v928, 2147483648
  %v953 = vxor.u32 %v931, 2147483648
  %v954 = vxor.u32 %v936, 2147483648
  %v955 = vxor.u32 %v939, 2147483648
  %v956 = vxor.u32 %v944, 2147483648
  %v957 = vxor.u32 %v947, 2147483648
  %v958 = vmul.f32 %v950, 1.442695
  %v959 = vpow.pop %v958
  %v960 = vmul.f32 %v951, 1.442695
  %v961 = vpow.pop %v960
  %v962 = vmul.f32 %v952, 1.442695
  %v963 = vpow.pop %v962
  %v964 = vmul.f32 %v953, 1.442695
  %v965 = vpow.pop %v964
  %v966 = vmul.f32 %v954, 1.442695
  %v967 = vpow.pop %v966
  %v968 = vmul.f32 %v955, 1.442695
  %v969 = vpow.pop %v968
  %v970 = vmul.f32 %v956, 1.442695
  %v971 = vpow.pop %v970
  %v972 = vmul.f32 %v957, 1.442695
  %v973 = vpow.pop %v972
  %v974 = vadd.f32 %v959, 1.0
  %v975 = vadd.f32 %v961, 1.0
  %v976 = vadd.f32 %v963, 1.0
  %v977 = vadd.f32 %v965, 1.0
  %v978 = vadd.f32 %v967, 1.0
  %v979 = vadd.f32 %v969, 1.0
  %v980 = vadd.f32 %v971, 1.0
  %v981 = vadd.f32 %v973, 1.0
  %v982 = vrcp.pop %v974
  %v983 = vmul.f32 1.0, %v982
  %v984 = vrcp.pop %v975
  %v985 = vmul.f32 1.0, %v984
  %v986 = vrcp.pop %v976
  %v987 = vmul.f32 1.0, %v986
  %v988 = vrcp.pop %v977
  %v989 = vmul.f32 1.0, %v988
  %v990 = vrcp.pop %v978
  %v991 = vmul.f32 1.0, %v990
  %v992 = vrcp.pop %v979
  %v993 = vmul.f32 1.0, %v992
  %v994 = vrcp.pop %v980
  %v995 = vmul.f32 1.0, %v994
  %v996 = vrcp.pop %v981
  %v997 = vmul.f32 1.0, %v996
  %vm998 = vcmask 64512
  %999 = vst.msk [vmem:[%s6] sm:$0xff] %vm998, %v983
  %1000 = vst.msk [vmem:[%s6 + $0x8] sm:$0xff] %vm998, %v985
  %1001 = vst.msk [vmem:[%s6 + $0x10] sm:$0xff] %vm998, %v987
  %1002 = vst.msk [vmem:[%s6 + $0x18] sm:$0xff] %vm998, %v989
  %1003 = vst.msk [vmem:[%s6 + $0x20] sm:$0xff] %vm998, %v991
  %1004 = vst.msk [vmem:[%s6 + $0x28] sm:$0xff] %vm998, %v993
  %1005 = vst.msk [vmem:[%s6 + $0x30] sm:$0xff] %vm998, %v995
  %1006 = vst.msk [vmem:[%s6 + $0x38] sm:$0xff] %vm998, %v997
  // Predicated region
  $region30: #{lstm_model_forward.3} parent=0 // pred_check
    _
  $region31: #{lstm_model_forward.3} parent=0 // pred_check_branch
    %1008 = sbr.rel (0) target = $region33
  $region32: #{lstm_model_forward.3} parent=0 // pred_region
    _
  $region33: #{lstm_model_forward.3} parent=0 // pred_fallthru
    _
  // Predicated region
  $region34: #{lstm_model_forward.3} parent=0 // pred_check
    _
  $region35: #{lstm_model_forward.3} parent=0 // pred_check_branch
    %1010 = sbr.rel (0) target = $region37
  $region36: #{lstm_model_forward.3} parent=0 // pred_region
    _
  $region37: #{lstm_model_forward.3} parent=0 // pred_fallthru
    _

</llo_original>
